<compile_context>
chip_gen: v7x
topology: tpu7x:2x2x1
jax: 0.10.0
libtpu: 0.0.40
codegen_flags: <defaults>
</compile_context>

<pallas_src>
import jax
import jax.numpy as jnp
from jax.experimental import pallas as pl
from jax.experimental.pallas import tpu as pltpu

MAX_Z = 4        # args.max_z
D_OBS = 16       # cent_obs_dim - max_z
DIN = MAX_Z + D_OBS
H = 32           # args.hidden_size
EPS = 1e-5       # nn.LayerNorm default eps
MASK_LANE = 127  # lane of the per-row reset mask inside the input slab

# ---- vector-row indices inside the packed (728, 128) parameter buffer ----
R_LNIN_G, R_LNIN_B = 0, 1          # fused input LN  [z | x]
R_B1, R_G1, R_T1 = 2, 3, 4         # fused hidden-1  [x-branch | z-branch]
R_B2, R_G2, R_T2 = 5, 6, 7         # fused hidden-2
R_BG = 8                           # GRU bias  [r | z | n_x | h_n]
R_RG, R_RB = 9, 10                 # RNNLayer.norm
R_CFG, R_CFB = 11, 12              # base2 feature LN (64 lanes, [feat_r | feat_z])
R_CB1, R_CG1, R_CT1 = 13, 14, 15
R_CB2, R_CG2, R_CT2 = 16, 17, 18
R_BV = 19                          # value bias (lane 0)
R_MZ, R_MX, R_MA, R_MB = 20, 21, 22, 23   # precomputed lane masks
_NV = 24
OFF_W1 = _NV            # (128,128) block-diag front-end layer 1
OFF_W2 = OFF_W1 + 128   # (128,128) block-diag front-end layer 2
OFF_WG = OFF_W2 + 128   # (128,128) fused GRU gates  [r | z | n_x | h_n]
OFF_WC1 = OFF_WG + 128  # (64,128)  base2 layer 1
OFF_WC2 = OFF_WC1 + 64  # (128,128) base2 layer 2
OFF_WV = OFF_WC2 + 128  # (128,128) value head (col 0)
NROWS = OFF_WV + 128    # 728


def _ln(x, g, b):
    """Single-pass LayerNorm over the last axis (all lanes real)."""
    n = x.shape[-1]
    s = jnp.sum(x, axis=-1, keepdims=True)
    ss = jnp.sum(x * x, axis=-1, keepdims=True)
    mu = s * (1.0 / n)
    inv = jax.lax.rsqrt(ss * (1.0 / n) - mu * mu + EPS)
    return (x - mu) * inv * g + b


def _ln_masked(x, m, n, g, b):
    """LayerNorm over the `m`-masked lanes of a 128-lane slab (pad lanes: gamma=beta=0 -> 0)."""
    xm = x * m
    s = jnp.sum(xm, axis=-1, keepdims=True)
    ss = jnp.sum(xm * x, axis=-1, keepdims=True)
    mu = s * (1.0 / n)
    inv = jax.lax.rsqrt(ss * (1.0 / n) - mu * mu + EPS)
    return (x - mu) * inv * g + b


def _ln_seg2(x, m0, m1, n0, n1, g, b):
    """Two independent LayerNorms over the m0 / m1 lane segments of a 128-lane slab, fused in one
    pass (four independent masked reductions). Lanes outside both segments produce 0 (gamma=beta=0)."""
    x0 = x * m0
    x1 = x * m1
    s0 = jnp.sum(x0, axis=-1, keepdims=True)
    ss0 = jnp.sum(x0 * x, axis=-1, keepdims=True)
    s1 = jnp.sum(x1, axis=-1, keepdims=True)
    ss1 = jnp.sum(x1 * x, axis=-1, keepdims=True)
    mu0 = s0 * (1.0 / n0)
    mu1 = s1 * (1.0 / n1)
    i0 = jax.lax.rsqrt(ss0 * (1.0 / n0) - mu0 * mu0 + EPS)
    i1 = jax.lax.rsqrt(ss1 * (1.0 / n1) - mu1 * mu1 + EPS)
    mu = m0 * mu0 + m1 * mu1
    inv = m0 * i0 + m1 * i1
    return (x - mu) * inv * g + b


def critic_kernel(xin_ref, h0_ref, par_ref, out_ref, hstate_ref):
    """Grid = (batch_tile b [parallel], time t [arbitrary]).
    xin_ref:  (1, TB, 128)  [obs(0:20) | 0 | mask(127)]
    h0_ref:   (TB, 128)     initial hidden at lanes 64:96 (zeros elsewhere)
    par_ref:  (728, 128)    packed params, VMEM-resident across the grid
    out_ref:  (1, TB, 128)  [value(0) | 0 | h_new(64:96) | 0]
    hstate_ref: VMEM scratch carrying the hidden state (lanes 64:96) across t."""
    f32 = jnp.float32
    t = pl.program_id(1)

    def vrow(i, n=128):                 # (1, n) parameter vector (static slice)
        return par_ref[i:i + 1, 0:n]

    def wmat(off, k):                   # (k, 128) full-lane weight block
        return par_ref[off:off + k, :]

    @pl.when(t == 0)
    def _():
        hstate_ref[...] = h0_ref[...]

    xin = xin_ref[0]                                           # (TB, 128)
    m_z, m_x = vrow(R_MZ), vrow(R_MX)
    m_a, m_b = vrow(R_MA), vrow(R_MB)

    # ---- fused self.base + self.z_base (block-diagonal MLPBase pair), 128-lane activations ----
    h = _ln_seg2(xin, m_z, m_x, MAX_Z, D_OBS, vrow(R_LNIN_G), vrow(R_LNIN_B))
    h = jnp.dot(h, wmat(OFF_W1, 128), preferred_element_type=f32) + vrow(R_B1)
    h = _ln_seg2(jnp.maximum(h, 0.0), m_a, m_b, H, H, vrow(R_G1), vrow(R_T1))
    h = jnp.dot(h, wmat(OFF_W2, 128), preferred_element_type=f32) + vrow(R_B2)
    h2 = _ln_seg2(jnp.maximum(h, 0.0), m_a, m_b, H, H, vrow(R_G2), vrow(R_T2))   # [fx | fz | 0 | 0]

    # ---- self.rnn: single fused GRU-step matmul, gate cols [r | z | n_x | h_n] ----
    mask = xin[:, MASK_LANE:MASK_LANE + 1]                     # (TB, 1)
    hp128 = hstate_ref[...] * mask                             # masked h_prev at lanes 64:96
    hslab = h2 + hp128                                         # [fx | fz | h_prev | 0]
    g = jnp.dot(hslab, wmat(OFF_WG, 128), preferred_element_type=f32) + vrow(R_BG)
    r = jax.nn.sigmoid(g[:, 0:H])
    zg = jax.nn.sigmoid(g[:, H:2 * H])
    n = jnp.tanh(g[:, 2 * H:3 * H] + r * g[:, 3 * H:4 * H])    # g[:,3H:4H] = W_hn h + b_hn
    h_new = (1.0 - zg) * n + zg * hp128[:, 2 * H:3 * H]        # pre-norm rnn state (PyTorch hxs out)
    hnew128 = jnp.concatenate(
        [jnp.zeros((h_new.shape[0], 2 * H), f32), h_new,
         jnp.zeros((h_new.shape[0], H), f32)], axis=-1)        # h_new at lanes 64:96
    hstate_ref[...] = hnew128                                  # carry to step t+1

    # ---- RNNLayer.norm, self.base2, self.v_out ----
    feat_r = _ln(h_new, vrow(R_RG, H), vrow(R_RB, H))
    # TODO(synk): this is the one remaining lane concat; feat_z already sits at lanes H:2H of h2.
    c = jnp.concatenate([feat_r, h2[:, H:2 * H]], axis=-1)     # (TB, 2H) [feat_r | feat_z]
    c = _ln(c, vrow(R_CFG, 2 * H), vrow(R_CFB, 2 * H))
    c = jnp.dot(c, wmat(OFF_WC1, 64), preferred_element_type=f32) + vrow(R_CB1)
    c = _ln_masked(jnp.maximum(c, 0.0), m_a, H, vrow(R_CG1), vrow(R_CT1))
    c = jnp.dot(c, wmat(OFF_WC2, 128), preferred_element_type=f32) + vrow(R_CB2)
    c = _ln_masked(jnp.maximum(c, 0.0), m_a, H, vrow(R_CG2), vrow(R_CT2))
    v128 = jnp.dot(c, wmat(OFF_WV, 128), preferred_element_type=f32) + vrow(R_BV)  # value @ lane 0

    out_ref[0] = v128 + hnew128                                # single full-lane (TB,128) store


def pack_params(params):
    """Pack the 38 raw parameter arrays (layout of make_params) into one (728, 128) f32 buffer:
    24 vector rows (biases, LN params, lane masks) + 6 full-128-lane weight blocks. Done once."""
    (x_fg, x_fb, x_w1, x_b1, x_g1, x_t1, x_w2, x_b2, x_g2, x_t2) = params[0:10]
    (z_fg, z_fb, z_w1, z_b1, z_g1, z_t1, z_w2, z_b2, z_g2, z_t2) = params[10:20]
    (c_fg, c_fb, c_w1, c_b1, c_g1, c_t1, c_w2, c_b2, c_g2, c_t2) = params[20:30]
    w_ih, w_hh, b_ih, b_hh, rg, rb = params[30:36]
    wv, bv = params[36], params[37]

    def row(*parts):
        v = jnp.concatenate([jnp.asarray(p, jnp.float32).reshape(-1) for p in parts])
        return jnp.pad(v, (0, 128 - v.shape[0]))

    lane = jnp.arange(128)

    def lane_mask(lo, hi):
        return ((lane >= lo) & (lane < hi)).astype(jnp.float32)

    rows = [
        row(z_fg, x_fg), row(z_fb, x_fb),                                   # 0,1  input LN [z|x]
        row(x_b1, z_b1), row(x_g1, z_g1), row(x_t1, z_t1),                  # 2-4  fused hidden-1
        row(x_b2, z_b2), row(x_g2, z_g2), row(x_t2, z_t2),                  # 5-7  fused hidden-2
        row(b_ih[:, :2 * H] + b_hh[:, :2 * H], b_ih[:, 2 * H:], b_hh[:, 2 * H:]),  # 8 [r|z|n_x|h_n]
        row(rg), row(rb),                                                   # 9,10 RNNLayer.norm
        row(c_fg), row(c_fb),                                               # 11,12 base2 feature LN
        row(c_b1), row(c_g1), row(c_t1),                                    # 13-15
        row(c_b2), row(c_g2), row(c_t2),                                    # 16-18
        row(bv),                                                            # 19 value bias (lane 0)
        lane_mask(0, MAX_Z), lane_mask(MAX_Z, DIN),                         # 20,21  m_z, m_x
        lane_mask(0, H), lane_mask(H, 2 * H),                               # 22,23  m_a, m_b
    ]
    vec = jnp.stack(rows)
    assert vec.shape == (_NV, 128)

    def blk(k):
        return jnp.zeros((k, 128), jnp.float32)

    f32 = lambda a: jnp.asarray(a, jnp.float32)
    # block-diagonal front-end (hidden lanes: [x-branch 0:H | z-branch H:2H])
    w1 = blk(128).at[MAX_Z:DIN, 0:H].set(f32(x_w1)).at[0:MAX_Z, H:2 * H].set(f32(z_w1))
    w2 = blk(128).at[0:H, 0:H].set(f32(x_w2)).at[H:2 * H, H:2 * H].set(f32(z_w2))
    # fused GRU gates: slab rows [fx 0:H | fz H:2H | h_prev 2H:3H] -> cols [r|z|n_x|h_n]
    wg = (blk(128)
          .at[0:H, 0:3 * H].set(f32(w_ih))
          .at[2 * H:3 * H, 0:2 * H].set(f32(w_hh[:, 0:2 * H]))
          .at[2 * H:3 * H, 3 * H:4 * H].set(f32(w_hh[:, 2 * H:3 * H])))
    wc1 = blk(64).at[0:2 * H, 0:H].set(f32(c_w1))
    wc2 = blk(128).at[0:H, 0:H].set(f32(c_w2))
    wvb = blk(128).at[0:H, 0:1].set(f32(wv))

    packed = jnp.concatenate([vec, w1, w2, wg, wc1, wc2, wvb], axis=0)
    assert packed.shape == (NROWS, 128)
    return packed


def r_in_critic_forward(cent_obs, rnn_states, masks, packed_params):
    """Single-step (T=1) and multi-step rollout (T = cent_obs.shape[0] // rnn_states.shape[0])."""
    cent_obs = jnp.asarray(cent_obs, jnp.float32)
    rnn_states = jnp.asarray(rnn_states, jnp.float32)
    masks = jnp.asarray(masks, jnp.float32)
    bt = cent_obs.shape[0]
    n = rnn_states.shape[0]
    t_steps = bt // n
    assert t_steps * n == bt

    tb = 128 if n >= 128 else max(8, ((n + 7) // 8) * 8)       # batch tile (rows)
    np_ = ((n + tb - 1) // tb) * tb
    nb = np_ // tb

    # pack the activation inputs into lane-dense slabs (1 DMA per grid step instead of 3)
    obs = cent_obs.reshape(t_steps, n, DIN)
    msk = masks.reshape(t_steps, n, 1)
    xin = jnp.zeros((t_steps, np_, 128), jnp.float32)
    xin = xin.at[:, :n, 0:DIN].set(obs)
    xin = xin.at[:, :n, MASK_LANE:MASK_LANE + 1].set(msk)
    h0 = jnp.zeros((np_, 128), jnp.float32)
    h0 = h0.at[:n, 2 * H:3 * H].set(rnn_states.reshape(n, H))  # recurrent_N == 1

    out = pl.pallas_call(
        critic_kernel,
        out_shape=jax.ShapeDtypeStruct((t_steps, np_, 128), jnp.float32),
        grid_spec=pltpu.PrefetchScalarGridSpec(
            num_scalar_prefetch=0,
            grid=(nb, t_steps),
            in_specs=[
                pl.BlockSpec((1, tb, 128), lambda b, t: (t, b, 0)),
                pl.BlockSpec((tb, 128), lambda b, t: (b, 0)),
                pl.BlockSpec((NROWS, 128), lambda b, t: (0, 0)),   # params stay VMEM-resident
            ],
            out_specs=pl.BlockSpec((1, tb, 128), lambda b, t: (t, b, 0)),
            scratch_shapes=[pltpu.VMEM((tb, 128), jnp.float32)],    # carried GRU hidden state
        ),
        compiler_params=pltpu.CompilerParams(
            dimension_semantics=("parallel", "arbitrary")),
    )(xin, h0, packed_params)

    values = out[:, :n, 0:1].reshape(t_steps * n, 1)
    rnn_out = out[t_steps - 1, :n, 2 * H:3 * H].reshape(n, 1, H)
    return values, rnn_out


def make_params(key):
    keys = iter(jax.random.split(key, 64))

    def lin(din, dout, scale=0.1):
        w = scale * jax.random.normal(next(keys), (din, dout), jnp.float32)
        b = scale * jax.random.normal(next(keys), (1, dout), jnp.float32)
        return w, b

    def ln(d):
        # PyTorch LayerNorm default init: gamma=1, beta=0
        return jnp.ones((1, d), jnp.float32), jnp.zeros((1, d), jnp.float32)

    def mlp_base(din):
        fn_g, fn_b = ln(din)
        w1, b1 = lin(din, H)
        g1, bt1 = ln(H)
        w2, b2 = lin(H, H)
        g2, bt2 = ln(H)
        return [fn_g, fn_b, w1, b1, g1, bt1, w2, b2, g2, bt2]

    params = []
    params += mlp_base(D_OBS)      # self.base
    params += mlp_base(MAX_Z)      # self.z_base
    params += mlp_base(2 * H)      # self.base2
    w_ih, b_ih = lin(H, 3 * H)     # GRU weight_ih_l0 (stored transposed: [in, 3H], cols [r|z|n])
    w_hh, b_hh = lin(H, 3 * H)     # GRU weight_hh_l0 (stored transposed: [H, 3H])
    rg, rb = ln(H)                 # RNNLayer.norm
    params += [w_ih, w_hh, b_ih, b_hh, rg, rb]
    wv, bv = lin(H, 1)             # self.v_out (use_popart=False -> plain Linear)
    params += [wv, bv]
    return params


def reference_forward(cent_obs, rnn_states, masks, params):
    """Pure-JAX reference with PyTorch semantics (two-pass LayerNorm, unfused weights, step loop)."""
    def ln(x, g, b):
        mu = jnp.mean(x, -1, keepdims=True)
        var = jnp.mean((x - mu) ** 2, -1, keepdims=True)
        return (x - mu) / jnp.sqrt(var + EPS) * g + b

    def mlp(x, p):
        fg, fb, w1, b1, g1, t1, w2, b2, g2, t2 = p
        x = ln(x, fg, fb)
        hd = ln(jnp.maximum(x @ w1 + b1, 0.0), g1, t1)
        return ln(jnp.maximum(hd @ w2 + b2, 0.0), g2, t2)

    w_ih, w_hh, b_ih, b_hh, rg, rb = params[30:36]
    wv, bv = params[36], params[37]
    n_ag = rnn_states.shape[0]
    t_steps = cent_obs.shape[0] // n_ag
    xf = mlp(cent_obs[:, MAX_Z:], params[0:10]).reshape(t_steps, n_ag, H)
    m_t = masks.reshape(t_steps, n_ag, 1)
    h = rnn_states.reshape(n_ag, H)
    feats = []
    for t in range(t_steps):
        hp = h * m_t[t]
        gi = xf[t] @ w_ih + b_ih
        gh = hp @ w_hh + b_hh
        r = jax.nn.sigmoid(gi[:, :H] + gh[:, :H])
        z = jax.nn.sigmoid(gi[:, H:2 * H] + gh[:, H:2 * H])
        nn_ = jnp.tanh(gi[:, 2 * H:] + r * gh[:, 2 * H:])
        h = (1.0 - z) * nn_ + z * hp
        feats.append(ln(h, rg, rb))
    feat = jnp.stack(feats, 0).reshape(t_steps * n_ag, H)
    zf = mlp(cent_obs[:, :MAX_Z], params[10:20])
    f2 = mlp(jnp.concatenate([feat, zf], -1), params[20:30])
    return f2 @ wv + bv, h.reshape(n_ag, 1, H)


if __name__ == "__main__":
    key = jax.random.PRNGKey(0)
    kp, k1, k2, k3, k4, k5 = jax.random.split(key, 6)
    params = make_params(kp)
    packed = pack_params(params)

    N = 8
    rnn_states = jax.random.normal(k2, (N, 1, H), jnp.float32)  # recurrent_N = 1

    # ---- single-step path (T = 1) ----
    cent_obs = jax.random.normal(k1, (N, DIN), jnp.float32)
    masks = (jax.random.uniform(k3, (N, 1)) > 0.2).astype(jnp.float32)
    values, rnn_out = r_in_critic_forward(cent_obs, rnn_states, masks, packed)
    jax.block_until_ready((values, rnn_out))
    assert values.shape == (N, 1) and values.dtype == jnp.float32
    assert rnn_out.shape == (N, 1, H)
    ref_v, ref_h = reference_forward(cent_obs, rnn_states, masks, params)
    assert float(jnp.max(jnp.abs(values - ref_v))) < 2e-3
    assert float(jnp.max(jnp.abs(rnn_out - ref_h))) < 2e-3

    # ---- multi-step rollout path (T = 4), time folded into the same pallas_call grid ----
    T = 4
    cent_obs_m = jax.random.normal(k4, (T * N, DIN), jnp.float32)
    masks_m = (jax.random.uniform(k5, (T * N, 1)) > 0.2).astype(jnp.float32)
    values_m, rnn_out_m = r_in_critic_forward(cent_obs_m, rnn_states, masks_m, packed)
    jax.block_until_ready((values_m, rnn_out_m))
    assert values_m.shape == (T * N, 1) and rnn_out_m.shape == (N, 1, H)
    ref_vm, ref_hm = reference_forward(cent_obs_m, rnn_states, masks_m, params)
    assert float(jnp.max(jnp.abs(values_m - ref_vm))) < 2e-3
    assert float(jnp.max(jnp.abs(rnn_out_m - ref_hm))) < 2e-3

    print("KERNEL_OK")
</pallas_src>

<mosaic_0001>
module attributes {stable_mosaic.version = 11 : i64} {
  func.func @critic_kernel(%arg0: i32, %arg1: i32, %arg2: memref<1x8x128xf32, #tpu.memory_space<vmem>>, %arg3: memref<8x128xf32, #tpu.memory_space<vmem>>, %arg4: memref<728x128xf32, #tpu.memory_space<vmem>>, %arg5: memref<1x8x128xf32, #tpu.memory_space<vmem>>, %arg6: memref<8x128xf32, #tpu.memory_space<vmem>>) attributes {dimension_semantics = [#tpu.dimension_semantics<parallel>, #tpu.dimension_semantics<arbitrary>], iteration_bounds = array<i64: 1, 1>, scalar_prefetch = 0 : i64, scratch_operands = 1 : i64, tpu.core_type = #tpu.core_type<tc>, window_params = [{transform_indices = @transform_0, window_bounds = array<i64: 1, 8, 128>}, {transform_indices = @transform_1, window_bounds = array<i64: 8, 128>}, {pipeline_mode = #tpu.pipeline_mode<synchronous>, transform_indices = @transform_2, window_bounds = array<i64: 728, 128>}, {transform_indices = @transform_3, window_bounds = array<i64: 1, 8, 128>}]} {
    %c0_i32 = arith.constant 0 : i32
    %0 = arith.cmpi eq, %arg1, %c0_i32 : i32
    %1 = arith.extui %0 : i1 to i32
    %c0_i32_0 = arith.constant 0 : i32
    %2 = arith.cmpi ne, %1, %c0_i32_0 : i32
    scf.if %2 {
      %c0_105 = arith.constant 0 : index
      %c0_106 = arith.constant 0 : index
      %347 = vector.load %arg3[%c0_105, %c0_106] : memref<8x128xf32, #tpu.memory_space<vmem>>, vector<8x128xf32>
      %c0_107 = arith.constant 0 : index
      %c0_108 = arith.constant 0 : index
      %348 = vector.load %arg6[%c0_107, %c0_108] : memref<8x128xf32, #tpu.memory_space<vmem>>, vector<8x128xf32>
      tpu.vector_store %arg6[%c0_107, %c0_108], %347 {strides = array<i32>} : memref<8x128xf32, #tpu.memory_space<vmem>>, vector<8x128xf32>,
    } else {
    }
    %c0 = arith.constant 0 : index
    %c0_1 = arith.constant 0 : index
    %c0_2 = arith.constant 0 : index
    %3 = vector.load %arg2[%c0, %c0_1, %c0_2] : memref<1x8x128xf32, #tpu.memory_space<vmem>>, vector<1x8x128xf32>
    %4 = vector.shape_cast %3 : vector<1x8x128xf32> to vector<8x128xf32>
    %c20 = arith.constant 20 : index
    %c0_3 = arith.constant 0 : index
    %5 = vector.load %arg4[%c20, %c0_3] : memref<728x128xf32, #tpu.memory_space<vmem>>, vector<1x128xf32>
    %c21 = arith.constant 21 : index
    %c0_4 = arith.constant 0 : index
    %6 = vector.load %arg4[%c21, %c0_4] : memref<728x128xf32, #tpu.memory_space<vmem>>, vector<1x128xf32>
    %c22 = arith.constant 22 : index
    %c0_5 = arith.constant 0 : index
    %7 = vector.load %arg4[%c22, %c0_5] : memref<728x128xf32, #tpu.memory_space<vmem>>, vector<1x128xf32>
    %c23 = arith.constant 23 : index
    %c0_6 = arith.constant 0 : index
    %8 = vector.load %arg4[%c23, %c0_6] : memref<728x128xf32, #tpu.memory_space<vmem>>, vector<1x128xf32>
    %c0_7 = arith.constant 0 : index
    %c0_8 = arith.constant 0 : index
    %9 = vector.load %arg4[%c0_7, %c0_8] : memref<728x128xf32, #tpu.memory_space<vmem>>, vector<1x128xf32>
    %c1 = arith.constant 1 : index
    %c0_9 = arith.constant 0 : index
    %10 = vector.load %arg4[%c1, %c0_9] : memref<728x128xf32, #tpu.memory_space<vmem>>, vector<1x128xf32>
    %11 = vector.broadcast %5 : vector<1x128xf32> to vector<8x128xf32>
    %12 = arith.mulf %4, %11 : vector<8x128xf32>
    %13 = vector.broadcast %6 : vector<1x128xf32> to vector<8x128xf32>
    %14 = arith.mulf %4, %13 : vector<8x128xf32>
    %cst = arith.constant dense<0.000000e+00> : vector<8xf32>
    %15 = vector.multi_reduction <add>, %12, %cst [1] : vector<8x128xf32> to vector<8xf32>
    %16 = vector.shape_cast %15 : vector<8xf32> to vector<8x1xf32>
    %17 = arith.mulf %12, %4 : vector<8x128xf32>
    %cst_10 = arith.constant dense<0.000000e+00> : vector<8xf32>
    %18 = vector.multi_reduction <add>, %17, %cst_10 [1] : vector<8x128xf32> to vector<8xf32>
    %19 = vector.shape_cast %18 : vector<8xf32> to vector<8x1xf32>
    %cst_11 = arith.constant dense<0.000000e+00> : vector<8xf32>
    %20 = vector.multi_reduction <add>, %14, %cst_11 [1] : vector<8x128xf32> to vector<8xf32>
    %21 = vector.shape_cast %20 : vector<8xf32> to vector<8x1xf32>
    %22 = arith.mulf %14, %4 : vector<8x128xf32>
    %cst_12 = arith.constant dense<0.000000e+00> : vector<8xf32>
    %23 = vector.multi_reduction <add>, %22, %cst_12 [1] : vector<8x128xf32> to vector<8xf32>
    %24 = vector.shape_cast %23 : vector<8xf32> to vector<8x1xf32>
    %cst_13 = arith.constant 2.500000e-01 : f32
    %25 = vector.broadcast %cst_13 : f32 to vector<8x1xf32>
    %26 = arith.mulf %16, %25 : vector<8x1xf32>
    %cst_14 = arith.constant 6.250000e-02 : f32
    %27 = vector.broadcast %cst_14 : f32 to vector<8x1xf32>
    %28 = arith.mulf %21, %27 : vector<8x1xf32>
    %cst_15 = arith.constant 2.500000e-01 : f32
    %29 = vector.broadcast %cst_15 : f32 to vector<8x1xf32>
    %30 = arith.mulf %19, %29 : vector<8x1xf32>
    %31 = arith.mulf %26, %26 : vector<8x1xf32>
    %32 = arith.subf %30, %31 : vector<8x1xf32>
    %cst_16 = arith.constant 9.99999974E-6 : f32
    %33 = vector.broadcast %cst_16 : f32 to vector<8x1xf32>
    %34 = arith.addf %32, %33 : vector<8x1xf32>
    %35 = math.rsqrt %34 : vector<8x1xf32>
    %cst_17 = arith.constant 6.250000e-02 : f32
    %36 = vector.broadcast %cst_17 : f32 to vector<8x1xf32>
    %37 = arith.mulf %24, %36 : vector<8x1xf32>
    %38 = arith.mulf %28, %28 : vector<8x1xf32>
    %39 = arith.subf %37, %38 : vector<8x1xf32>
    %cst_18 = arith.constant 9.99999974E-6 : f32
    %40 = vector.broadcast %cst_18 : f32 to vector<8x1xf32>
    %41 = arith.addf %39, %40 : vector<8x1xf32>
    %42 = math.rsqrt %41 : vector<8x1xf32>
    %43 = vector.broadcast %5 : vector<1x128xf32> to vector<8x128xf32>
    %44 = vector.broadcast %26 : vector<8x1xf32> to vector<8x128xf32>
    %45 = arith.mulf %43, %44 : vector<8x128xf32>
    %46 = vector.broadcast %6 : vector<1x128xf32> to vector<8x128xf32>
    %47 = vector.broadcast %28 : vector<8x1xf32> to vector<8x128xf32>
    %48 = arith.mulf %46, %47 : vector<8x128xf32>
    %49 = arith.addf %45, %48 : vector<8x128xf32>
    %50 = vector.broadcast %5 : vector<1x128xf32> to vector<8x128xf32>
    %51 = vector.broadcast %35 : vector<8x1xf32> to vector<8x128xf32>
    %52 = arith.mulf %50, %51 : vector<8x128xf32>
    %53 = vector.broadcast %6 : vector<1x128xf32> to vector<8x128xf32>
    %54 = vector.broadcast %42 : vector<8x1xf32> to vector<8x128xf32>
    %55 = arith.mulf %53, %54 : vector<8x128xf32>
    %56 = arith.addf %52, %55 : vector<8x128xf32>
    %57 = arith.subf %4, %49 : vector<8x128xf32>
    %58 = arith.mulf %57, %56 : vector<8x128xf32>
    %59 = vector.broadcast %9 : vector<1x128xf32> to vector<8x128xf32>
    %60 = arith.mulf %58, %59 : vector<8x128xf32>
    %61 = vector.broadcast %10 : vector<1x128xf32> to vector<8x128xf32>
    %62 = arith.addf %60, %61 : vector<8x128xf32>
    %c24 = arith.constant 24 : index
    %c0_19 = arith.constant 0 : index
    %63 = vector.load %arg4[%c24, %c0_19] : memref<728x128xf32, #tpu.memory_space<vmem>>, vector<128x128xf32>
    %cst_20 = arith.constant dense<0.000000e+00> : vector<8x128xf32>
    %64 = tpu.matmul %62, %63, %cst_20 {dimension_numbers = #tpu.dot_dimension_numbers<[1], [0], [0], [1], [0, 0, 1, 1], [], []>} : vector<8x128xf32>, vector<128x128xf32>, vector<8x128xf32> -> vector<8x128xf32>
    %c2 = arith.constant 2 : index
    %c0_21 = arith.constant 0 : index
    %65 = vector.load %arg4[%c2, %c0_21] : memref<728x128xf32, #tpu.memory_space<vmem>>, vector<1x128xf32>
    %66 = vector.broadcast %65 : vector<1x128xf32> to vector<8x128xf32>
    %67 = arith.addf %64, %66 : vector<8x128xf32>
    %cst_22 = arith.constant 0.000000e+00 : f32
    %68 = vector.broadcast %cst_22 : f32 to vector<8x128xf32>
    %69 = arith.maximumf %67, %68 : vector<8x128xf32>
    %c3 = arith.constant 3 : index
    %c0_23 = arith.constant 0 : index
    %70 = vector.load %arg4[%c3, %c0_23] : memref<728x128xf32, #tpu.memory_space<vmem>>, vector<1x128xf32>
    %c4 = arith.constant 4 : index
    %c0_24 = arith.constant 0 : index
    %71 = vector.load %arg4[%c4, %c0_24] : memref<728x128xf32, #tpu.memory_space<vmem>>, vector<1x128xf32>
    %72 = vector.broadcast %7 : vector<1x128xf32> to vector<8x128xf32>
    %73 = arith.mulf %69, %72 : vector<8x128xf32>
    %74 = vector.broadcast %8 : vector<1x128xf32> to vector<8x128xf32>
    %75 = arith.mulf %69, %74 : vector<8x128xf32>
    %cst_25 = arith.constant dense<0.000000e+00> : vector<8xf32>
    %76 = vector.multi_reduction <add>, %73, %cst_25 [1] : vector<8x128xf32> to vector<8xf32>
    %77 = vector.shape_cast %76 : vector<8xf32> to vector<8x1xf32>
    %78 = arith.mulf %73, %69 : vector<8x128xf32>
    %cst_26 = arith.constant dense<0.000000e+00> : vector<8xf32>
    %79 = vector.multi_reduction <add>, %78, %cst_26 [1] : vector<8x128xf32> to vector<8xf32>
    %80 = vector.shape_cast %79 : vector<8xf32> to vector<8x1xf32>
    %cst_27 = arith.constant dense<0.000000e+00> : vector<8xf32>
    %81 = vector.multi_reduction <add>, %75, %cst_27 [1] : vector<8x128xf32> to vector<8xf32>
    %82 = vector.shape_cast %81 : vector<8xf32> to vector<8x1xf32>
    %83 = arith.mulf %75, %69 : vector<8x128xf32>
    %cst_28 = arith.constant dense<0.000000e+00> : vector<8xf32>
    %84 = vector.multi_reduction <add>, %83, %cst_28 [1] : vector<8x128xf32> to vector<8xf32>
    %85 = vector.shape_cast %84 : vector<8xf32> to vector<8x1xf32>
    %cst_29 = arith.constant 3.125000e-02 : f32
    %86 = vector.broadcast %cst_29 : f32 to vector<8x1xf32>
    %87 = arith.mulf %77, %86 : vector<8x1xf32>
    %cst_30 = arith.constant 3.125000e-02 : f32
    %88 = vector.broadcast %cst_30 : f32 to vector<8x1xf32>
    %89 = arith.mulf %82, %88 : vector<8x1xf32>
    %cst_31 = arith.constant 3.125000e-02 : f32
    %90 = vector.broadcast %cst_31 : f32 to vector<8x1xf32>
    %91 = arith.mulf %80, %90 : vector<8x1xf32>
    %92 = arith.mulf %87, %87 : vector<8x1xf32>
    %93 = arith.subf %91, %92 : vector<8x1xf32>
    %cst_32 = arith.constant 9.99999974E-6 : f32
    %94 = vector.broadcast %cst_32 : f32 to vector<8x1xf32>
    %95 = arith.addf %93, %94 : vector<8x1xf32>
    %96 = math.rsqrt %95 : vector<8x1xf32>
    %cst_33 = arith.constant 3.125000e-02 : f32
    %97 = vector.broadcast %cst_33 : f32 to vector<8x1xf32>
    %98 = arith.mulf %85, %97 : vector<8x1xf32>
    %99 = arith.mulf %89, %89 : vector<8x1xf32>
    %100 = arith.subf %98, %99 : vector<8x1xf32>
    %cst_34 = arith.constant 9.99999974E-6 : f32
    %101 = vector.broadcast %cst_34 : f32 to vector<8x1xf32>
    %102 = arith.addf %100, %101 : vector<8x1xf32>
    %103 = math.rsqrt %102 : vector<8x1xf32>
    %104 = vector.broadcast %7 : vector<1x128xf32> to vector<8x128xf32>
    %105 = vector.broadcast %87 : vector<8x1xf32> to vector<8x128xf32>
    %106 = arith.mulf %104, %105 : vector<8x128xf32>
    %107 = vector.broadcast %8 : vector<1x128xf32> to vector<8x128xf32>
    %108 = vector.broadcast %89 : vector<8x1xf32> to vector<8x128xf32>
    %109 = arith.mulf %107, %108 : vector<8x128xf32>
    %110 = arith.addf %106, %109 : vector<8x128xf32>
    %111 = vector.broadcast %7 : vector<1x128xf32> to vector<8x128xf32>
    %112 = vector.broadcast %96 : vector<8x1xf32> to vector<8x128xf32>
    %113 = arith.mulf %111, %112 : vector<8x128xf32>
    %114 = vector.broadcast %8 : vector<1x128xf32> to vector<8x128xf32>
    %115 = vector.broadcast %103 : vector<8x1xf32> to vector<8x128xf32>
    %116 = arith.mulf %114, %115 : vector<8x128xf32>
    %117 = arith.addf %113, %116 : vector<8x128xf32>
    %118 = arith.subf %69, %110 : vector<8x128xf32>
    %119 = arith.mulf %118, %117 : vector<8x128xf32>
    %120 = vector.broadcast %70 : vector<1x128xf32> to vector<8x128xf32>
    %121 = arith.mulf %119, %120 : vector<8x128xf32>
    %122 = vector.broadcast %71 : vector<1x128xf32> to vector<8x128xf32>
    %123 = arith.addf %121, %122 : vector<8x128xf32>
    %c152 = arith.constant 152 : index
    %c0_35 = arith.constant 0 : index
    %124 = vector.load %arg4[%c152, %c0_35] : memref<728x128xf32, #tpu.memory_space<vmem>>, vector<128x128xf32>
    %cst_36 = arith.constant dense<0.000000e+00> : vector<8x128xf32>
    %125 = tpu.matmul %123, %124, %cst_36 {dimension_numbers = #tpu.dot_dimension_numbers<[1], [0], [0], [1], [0, 0, 1, 1], [], []>} : vector<8x128xf32>, vector<128x128xf32>, vector<8x128xf32> -> vector<8x128xf32>
    %c5 = arith.constant 5 : index
    %c0_37 = arith.constant 0 : index
    %126 = vector.load %arg4[%c5, %c0_37] : memref<728x128xf32, #tpu.memory_space<vmem>>, vector<1x128xf32>
    %127 = vector.broadcast %126 : vector<1x128xf32> to vector<8x128xf32>
    %128 = arith.addf %125, %127 : vector<8x128xf32>
    %cst_38 = arith.constant 0.000000e+00 : f32
    %129 = vector.broadcast %cst_38 : f32 to vector<8x128xf32>
    %130 = arith.maximumf %128, %129 : vector<8x128xf32>
    %c6 = arith.constant 6 : index
    %c0_39 = arith.constant 0 : index
    %131 = vector.load %arg4[%c6, %c0_39] : memref<728x128xf32, #tpu.memory_space<vmem>>, vector<1x128xf32>
    %c7 = arith.constant 7 : index
    %c0_40 = arith.constant 0 : index
    %132 = vector.load %arg4[%c7, %c0_40] : memref<728x128xf32, #tpu.memory_space<vmem>>, vector<1x128xf32>
    %133 = vector.broadcast %7 : vector<1x128xf32> to vector<8x128xf32>
    %134 = arith.mulf %130, %133 : vector<8x128xf32>
    %135 = vector.broadcast %8 : vector<1x128xf32> to vector<8x128xf32>
    %136 = arith.mulf %130, %135 : vector<8x128xf32>
    %cst_41 = arith.constant dense<0.000000e+00> : vector<8xf32>
    %137 = vector.multi_reduction <add>, %134, %cst_41 [1] : vector<8x128xf32> to vector<8xf32>
    %138 = vector.shape_cast %137 : vector<8xf32> to vector<8x1xf32>
    %139 = arith.mulf %134, %130 : vector<8x128xf32>
    %cst_42 = arith.constant dense<0.000000e+00> : vector<8xf32>
    %140 = vector.multi_reduction <add>, %139, %cst_42 [1] : vector<8x128xf32> to vector<8xf32>
    %141 = vector.shape_cast %140 : vector<8xf32> to vector<8x1xf32>
    %cst_43 = arith.constant dense<0.000000e+00> : vector<8xf32>
    %142 = vector.multi_reduction <add>, %136, %cst_43 [1] : vector<8x128xf32> to vector<8xf32>
    %143 = vector.shape_cast %142 : vector<8xf32> to vector<8x1xf32>
    %144 = arith.mulf %136, %130 : vector<8x128xf32>
    %cst_44 = arith.constant dense<0.000000e+00> : vector<8xf32>
    %145 = vector.multi_reduction <add>, %144, %cst_44 [1] : vector<8x128xf32> to vector<8xf32>
    %146 = vector.shape_cast %145 : vector<8xf32> to vector<8x1xf32>
    %cst_45 = arith.constant 3.125000e-02 : f32
    %147 = vector.broadcast %cst_45 : f32 to vector<8x1xf32>
    %148 = arith.mulf %138, %147 : vector<8x1xf32>
    %cst_46 = arith.constant 3.125000e-02 : f32
    %149 = vector.broadcast %cst_46 : f32 to vector<8x1xf32>
    %150 = arith.mulf %143, %149 : vector<8x1xf32>
    %cst_47 = arith.constant 3.125000e-02 : f32
    %151 = vector.broadcast %cst_47 : f32 to vector<8x1xf32>
    %152 = arith.mulf %141, %151 : vector<8x1xf32>
    %153 = arith.mulf %148, %148 : vector<8x1xf32>
    %154 = arith.subf %152, %153 : vector<8x1xf32>
    %cst_48 = arith.constant 9.99999974E-6 : f32
    %155 = vector.broadcast %cst_48 : f32 to vector<8x1xf32>
    %156 = arith.addf %154, %155 : vector<8x1xf32>
    %157 = math.rsqrt %156 : vector<8x1xf32>
    %cst_49 = arith.constant 3.125000e-02 : f32
    %158 = vector.broadcast %cst_49 : f32 to vector<8x1xf32>
    %159 = arith.mulf %146, %158 : vector<8x1xf32>
    %160 = arith.mulf %150, %150 : vector<8x1xf32>
    %161 = arith.subf %159, %160 : vector<8x1xf32>
    %cst_50 = arith.constant 9.99999974E-6 : f32
    %162 = vector.broadcast %cst_50 : f32 to vector<8x1xf32>
    %163 = arith.addf %161, %162 : vector<8x1xf32>
    %164 = math.rsqrt %163 : vector<8x1xf32>
    %165 = vector.broadcast %7 : vector<1x128xf32> to vector<8x128xf32>
    %166 = vector.broadcast %148 : vector<8x1xf32> to vector<8x128xf32>
    %167 = arith.mulf %165, %166 : vector<8x128xf32>
    %168 = vector.broadcast %8 : vector<1x128xf32> to vector<8x128xf32>
    %169 = vector.broadcast %150 : vector<8x1xf32> to vector<8x128xf32>
    %170 = arith.mulf %168, %169 : vector<8x128xf32>
    %171 = arith.addf %167, %170 : vector<8x128xf32>
    %172 = vector.broadcast %7 : vector<1x128xf32> to vector<8x128xf32>
    %173 = vector.broadcast %157 : vector<8x1xf32> to vector<8x128xf32>
    %174 = arith.mulf %172, %173 : vector<8x128xf32>
    %175 = vector.broadcast %8 : vector<1x128xf32> to vector<8x128xf32>
    %176 = vector.broadcast %164 : vector<8x1xf32> to vector<8x128xf32>
    %177 = arith.mulf %175, %176 : vector<8x128xf32>
    %178 = arith.addf %174, %177 : vector<8x128xf32>
    %179 = arith.subf %130, %171 : vector<8x128xf32>
    %180 = arith.mulf %179, %178 : vector<8x128xf32>
    %181 = vector.broadcast %131 : vector<1x128xf32> to vector<8x128xf32>
    %182 = arith.mulf %180, %181 : vector<8x128xf32>
    %183 = vector.broadcast %132 : vector<1x128xf32> to vector<8x128xf32>
    %184 = arith.addf %182, %183 : vector<8x128xf32>
    %185 = vector.extract_strided_slice %4 {offsets = [0, 127], sizes = [8, 1], strides = [1, 1]} : vector<8x128xf32> to vector<8x1xf32>
    %c0_51 = arith.constant 0 : index
    %c0_52 = arith.constant 0 : index
    %186 = vector.load %arg6[%c0_51, %c0_52] : memref<8x128xf32, #tpu.memory_space<vmem>>, vector<8x128xf32>
    %187 = vector.broadcast %185 : vector<8x1xf32> to vector<8x128xf32>
    %188 = arith.mulf %186, %187 : vector<8x128xf32>
    %189 = arith.addf %184, %188 : vector<8x128xf32>
    %c280 = arith.constant 280 : index
    %c0_53 = arith.constant 0 : index
    %190 = vector.load %arg4[%c280, %c0_53] : memref<728x128xf32, #tpu.memory_space<vmem>>, vector<128x128xf32>
    %cst_54 = arith.constant dense<0.000000e+00> : vector<8x128xf32>
    %191 = tpu.matmul %189, %190, %cst_54 {dimension_numbers = #tpu.dot_dimension_numbers<[1], [0], [0], [1], [0, 0, 1, 1], [], []>} : vector<8x128xf32>, vector<128x128xf32>, vector<8x128xf32> -> vector<8x128xf32>
    %c8 = arith.constant 8 : index
    %c0_55 = arith.constant 0 : index
    %192 = vector.load %arg4[%c8, %c0_55] : memref<728x128xf32, #tpu.memory_space<vmem>>, vector<1x128xf32>
    %193 = vector.broadcast %192 : vector<1x128xf32> to vector<8x128xf32>
    %194 = arith.addf %191, %193 : vector<8x128xf32>
    %195 = vector.extract_strided_slice %194 {offsets = [0, 0], sizes = [8, 32], strides = [1, 1]} : vector<8x128xf32> to vector<8x32xf32>
    %196 = arith.negf %195 : vector<8x32xf32>
    %197 = math.exp %196 : vector<8x32xf32>
    %cst_56 = arith.constant 1.000000e+00 : f32
    %198 = vector.broadcast %cst_56 : f32 to vector<8x32xf32>
    %199 = arith.addf %198, %197 : vector<8x32xf32>
    %200 = arith.divf %198, %199 : vector<8x32xf32>
    %201 = vector.extract_strided_slice %194 {offsets = [0, 32], sizes = [8, 32], strides = [1, 1]} : vector<8x128xf32> to vector<8x32xf32>
    %202 = arith.negf %201 : vector<8x32xf32>
    %203 = math.exp %202 : vector<8x32xf32>
    %cst_57 = arith.constant 1.000000e+00 : f32
    %204 = vector.broadcast %cst_57 : f32 to vector<8x32xf32>
    %205 = arith.addf %204, %203 : vector<8x32xf32>
    %206 = arith.divf %204, %205 : vector<8x32xf32>
    %207 = vector.extract_strided_slice %194 {offsets = [0, 64], sizes = [8, 32], strides = [1, 1]} : vector<8x128xf32> to vector<8x32xf32>
    %208 = vector.extract_strided_slice %194 {offsets = [0, 96], sizes = [8, 32], strides = [1, 1]} : vector<8x128xf32> to vector<8x32xf32>
    %209 = arith.mulf %200, %208 : vector<8x32xf32>
    %210 = arith.addf %207, %209 : vector<8x32xf32>
    %211 = math.tanh %210 : vector<8x32xf32>
    %cst_58 = arith.constant 1.000000e+00 : f32
    %212 = vector.broadcast %cst_58 : f32 to vector<8x32xf32>
    %213 = arith.subf %212, %206 : vector<8x32xf32>
    %214 = arith.mulf %213, %211 : vector<8x32xf32>
    %215 = vector.extract_strided_slice %188 {offsets = [0, 64], sizes = [8, 32], strides = [1, 1]} : vector<8x128xf32> to vector<8x32xf32>
    %216 = arith.mulf %206, %215 : vector<8x32xf32>
    %217 = arith.addf %214, %216 : vector<8x32xf32>
    %cst_59 = arith.constant 0.000000e+00 : f32
    %218 = vector.broadcast %cst_59 : f32 to vector<8x64xf32>
    %cst_60 = arith.constant 0.000000e+00 : f32
    %219 = vector.broadcast %cst_60 : f32 to vector<8x32xf32>
    %220 = tpu.concatenate %218, %217, %219 in 1 : vector<8x64xf32>, vector<8x32xf32>, vector<8x32xf32> -> vector<8x128xf32>
    %c0_61 = arith.constant 0 : index
    %c0_62 = arith.constant 0 : index
    %221 = vector.load %arg6[%c0_61, %c0_62] : memref<8x128xf32, #tpu.memory_space<vmem>>, vector<8x128xf32>
    tpu.vector_store %arg6[%c0_61, %c0_62], %220 {strides = array<i32>} : memref<8x128xf32, #tpu.memory_space<vmem>>, vector<8x128xf32>,
    %c9 = arith.constant 9 : index
    %c0_63 = arith.constant 0 : index
    %222 = vector.load %arg4[%c9, %c0_63] : memref<728x128xf32, #tpu.memory_space<vmem>>, vector<1x32xf32>
    %c10 = arith.constant 10 : index
    %c0_64 = arith.constant 0 : index
    %223 = vector.load %arg4[%c10, %c0_64] : memref<728x128xf32, #tpu.memory_space<vmem>>, vector<1x32xf32>
    %cst_65 = arith.constant dense<0.000000e+00> : vector<8xf32>
    %224 = vector.multi_reduction <add>, %217, %cst_65 [1] : vector<8x32xf32> to vector<8xf32>
    %225 = vector.shape_cast %224 : vector<8xf32> to vector<8x1xf32>
    %226 = arith.mulf %217, %217 : vector<8x32xf32>
    %cst_66 = arith.constant dense<0.000000e+00> : vector<8xf32>
    %227 = vector.multi_reduction <add>, %226, %cst_66 [1] : vector<8x32xf32> to vector<8xf32>
    %228 = vector.shape_cast %227 : vector<8xf32> to vector<8x1xf32>
    %cst_67 = arith.constant 3.125000e-02 : f32
    %229 = vector.broadcast %cst_67 : f32 to vector<8x1xf32>
    %230 = arith.mulf %225, %229 : vector<8x1xf32>
    %cst_68 = arith.constant 3.125000e-02 : f32
    %231 = vector.broadcast %cst_68 : f32 to vector<8x1xf32>
    %232 = arith.mulf %228, %231 : vector<8x1xf32>
    %233 = arith.mulf %230, %230 : vector<8x1xf32>
    %234 = arith.subf %232, %233 : vector<8x1xf32>
    %cst_69 = arith.constant 9.99999974E-6 : f32
    %235 = vector.broadcast %cst_69 : f32 to vector<8x1xf32>
    %236 = arith.addf %234, %235 : vector<8x1xf32>
    %237 = math.rsqrt %236 : vector<8x1xf32>
    %238 = vector.broadcast %230 : vector<8x1xf32> to vector<8x32xf32>
    %239 = arith.subf %217, %238 : vector<8x32xf32>
    %240 = vector.broadcast %237 : vector<8x1xf32> to vector<8x32xf32>
    %241 = arith.mulf %239, %240 : vector<8x32xf32>
    %242 = vector.broadcast %222 : vector<1x32xf32> to vector<8x32xf32>
    %243 = arith.mulf %241, %242 : vector<8x32xf32>
    %244 = vector.broadcast %223 : vector<1x32xf32> to vector<8x32xf32>
    %245 = arith.addf %243, %244 : vector<8x32xf32>
    %246 = vector.extract_strided_slice %184 {offsets = [0, 32], sizes = [8, 32], strides = [1, 1]} : vector<8x128xf32> to vector<8x32xf32>
    %247 = tpu.concatenate %245, %246 in 1 : vector<8x32xf32>, vector<8x32xf32> -> vector<8x64xf32>
    %c11 = arith.constant 11 : index
    %c0_70 = arith.constant 0 : index
    %248 = vector.load %arg4[%c11, %c0_70] : memref<728x128xf32, #tpu.memory_space<vmem>>, vector<1x64xf32>
    %c12 = arith.constant 12 : index
    %c0_71 = arith.constant 0 : index
    %249 = vector.load %arg4[%c12, %c0_71] : memref<728x128xf32, #tpu.memory_space<vmem>>, vector<1x64xf32>
    %cst_72 = arith.constant dense<0.000000e+00> : vector<8xf32>
    %250 = vector.multi_reduction <add>, %247, %cst_72 [1] : vector<8x64xf32> to vector<8xf32>
    %251 = vector.shape_cast %250 : vector<8xf32> to vector<8x1xf32>
    %252 = arith.mulf %247, %247 : vector<8x64xf32>
    %cst_73 = arith.constant dense<0.000000e+00> : vector<8xf32>
    %253 = vector.multi_reduction <add>, %252, %cst_73 [1] : vector<8x64xf32> to vector<8xf32>
    %254 = vector.shape_cast %253 : vector<8xf32> to vector<8x1xf32>
    %cst_74 = arith.constant 1.562500e-02 : f32
    %255 = vector.broadcast %cst_74 : f32 to vector<8x1xf32>
    %256 = arith.mulf %251, %255 : vector<8x1xf32>
    %cst_75 = arith.constant 1.562500e-02 : f32
    %257 = vector.broadcast %cst_75 : f32 to vector<8x1xf32>
    %258 = arith.mulf %254, %257 : vector<8x1xf32>
    %259 = arith.mulf %256, %256 : vector<8x1xf32>
    %260 = arith.subf %258, %259 : vector<8x1xf32>
    %cst_76 = arith.constant 9.99999974E-6 : f32
    %261 = vector.broadcast %cst_76 : f32 to vector<8x1xf32>
    %262 = arith.addf %260, %261 : vector<8x1xf32>
    %263 = math.rsqrt %262 : vector<8x1xf32>
    %264 = vector.broadcast %256 : vector<8x1xf32> to vector<8x64xf32>
    %265 = arith.subf %247, %264 : vector<8x64xf32>
    %266 = vector.broadcast %263 : vector<8x1xf32> to vector<8x64xf32>
    %267 = arith.mulf %265, %266 : vector<8x64xf32>
    %268 = vector.broadcast %248 : vector<1x64xf32> to vector<8x64xf32>
    %269 = arith.mulf %267, %268 : vector<8x64xf32>
    %270 = vector.broadcast %249 : vector<1x64xf32> to vector<8x64xf32>
    %271 = arith.addf %269, %270 : vector<8x64xf32>
    %c408 = arith.constant 408 : index
    %c0_77 = arith.constant 0 : index
    %272 = vector.load %arg4[%c408, %c0_77] : memref<728x128xf32, #tpu.memory_space<vmem>>, vector<64x128xf32>
    %cst_78 = arith.constant dense<0.000000e+00> : vector<8x128xf32>
    %273 = tpu.matmul %271, %272, %cst_78 {dimension_numbers = #tpu.dot_dimension_numbers<[1], [0], [0], [1], [0, 0, 1, 1], [], []>} : vector<8x64xf32>, vector<64x128xf32>, vector<8x128xf32> -> vector<8x128xf32>
    %c13 = arith.constant 13 : index
    %c0_79 = arith.constant 0 : index
    %274 = vector.load %arg4[%c13, %c0_79] : memref<728x128xf32, #tpu.memory_space<vmem>>, vector<1x128xf32>
    %275 = vector.broadcast %274 : vector<1x128xf32> to vector<8x128xf32>
    %276 = arith.addf %273, %275 : vector<8x128xf32>
    %cst_80 = arith.constant 0.000000e+00 : f32
    %277 = vector.broadcast %cst_80 : f32 to vector<8x128xf32>
    %278 = arith.maximumf %276, %277 : vector<8x128xf32>
    %c14 = arith.constant 14 : index
    %c0_81 = arith.constant 0 : index
    %279 = vector.load %arg4[%c14, %c0_81] : memref<728x128xf32, #tpu.memory_space<vmem>>, vector<1x128xf32>
    %c15 = arith.constant 15 : index
    %c0_82 = arith.constant 0 : index
    %280 = vector.load %arg4[%c15, %c0_82] : memref<728x128xf32, #tpu.memory_space<vmem>>, vector<1x128xf32>
    %281 = vector.broadcast %7 : vector<1x128xf32> to vector<8x128xf32>
    %282 = arith.mulf %278, %281 : vector<8x128xf32>
    %cst_83 = arith.constant dense<0.000000e+00> : vector<8xf32>
    %283 = vector.multi_reduction <add>, %282, %cst_83 [1] : vector<8x128xf32> to vector<8xf32>
    %284 = vector.shape_cast %283 : vector<8xf32> to vector<8x1xf32>
    %285 = arith.mulf %282, %278 : vector<8x128xf32>
    %cst_84 = arith.constant dense<0.000000e+00> : vector<8xf32>
    %286 = vector.multi_reduction <add>, %285, %cst_84 [1] : vector<8x128xf32> to vector<8xf32>
    %287 = vector.shape_cast %286 : vector<8xf32> to vector<8x1xf32>
    %cst_85 = arith.constant 3.125000e-02 : f32
    %288 = vector.broadcast %cst_85 : f32 to vector<8x1xf32>
    %289 = arith.mulf %284, %288 : vector<8x1xf32>
    %cst_86 = arith.constant 3.125000e-02 : f32
    %290 = vector.broadcast %cst_86 : f32 to vector<8x1xf32>
    %291 = arith.mulf %287, %290 : vector<8x1xf32>
    %292 = arith.mulf %289, %289 : vector<8x1xf32>
    %293 = arith.subf %291, %292 : vector<8x1xf32>
    %cst_87 = arith.constant 9.99999974E-6 : f32
    %294 = vector.broadcast %cst_87 : f32 to vector<8x1xf32>
    %295 = arith.addf %293, %294 : vector<8x1xf32>
    %296 = math.rsqrt %295 : vector<8x1xf32>
    %297 = vector.broadcast %289 : vector<8x1xf32> to vector<8x128xf32>
    %298 = arith.subf %278, %297 : vector<8x128xf32>
    %299 = vector.broadcast %296 : vector<8x1xf32> to vector<8x128xf32>
    %300 = arith.mulf %298, %299 : vector<8x128xf32>
    %301 = vector.broadcast %279 : vector<1x128xf32> to vector<8x128xf32>
    %302 = arith.mulf %300, %301 : vector<8x128xf32>
    %303 = vector.broadcast %280 : vector<1x128xf32> to vector<8x128xf32>
    %304 = arith.addf %302, %303 : vector<8x128xf32>
    %c472 = arith.constant 472 : index
    %c0_88 = arith.constant 0 : index
    %305 = vector.load %arg4[%c472, %c0_88] : memref<728x128xf32, #tpu.memory_space<vmem>>, vector<128x128xf32>
    %cst_89 = arith.constant dense<0.000000e+00> : vector<8x128xf32>
    %306 = tpu.matmul %304, %305, %cst_89 {dimension_numbers = #tpu.dot_dimension_numbers<[1], [0], [0], [1], [0, 0, 1, 1], [], []>} : vector<8x128xf32>, vector<128x128xf32>, vector<8x128xf32> -> vector<8x128xf32>
    %c16 = arith.constant 16 : index
    %c0_90 = arith.constant 0 : index
    %307 = vector.load %arg4[%c16, %c0_90] : memref<728x128xf32, #tpu.memory_space<vmem>>, vector<1x128xf32>
    %308 = vector.broadcast %307 : vector<1x128xf32> to vector<8x128xf32>
    %309 = arith.addf %306, %308 : vector<8x128xf32>
    %cst_91 = arith.constant 0.000000e+00 : f32
    %310 = vector.broadcast %cst_91 : f32 to vector<8x128xf32>
    %311 = arith.maximumf %309, %310 : vector<8x128xf32>
    %c17 = arith.constant 17 : index
    %c0_92 = arith.constant 0 : index
    %312 = vector.load %arg4[%c17, %c0_92] : memref<728x128xf32, #tpu.memory_space<vmem>>, vector<1x128xf32>
    %c18 = arith.constant 18 : index
    %c0_93 = arith.constant 0 : index
    %313 = vector.load %arg4[%c18, %c0_93] : memref<728x128xf32, #tpu.memory_space<vmem>>, vector<1x128xf32>
    %314 = vector.broadcast %7 : vector<1x128xf32> to vector<8x128xf32>
    %315 = arith.mulf %311, %314 : vector<8x128xf32>
    %cst_94 = arith.constant dense<0.000000e+00> : vector<8xf32>
    %316 = vector.multi_reduction <add>, %315, %cst_94 [1] : vector<8x128xf32> to vector<8xf32>
    %317 = vector.shape_cast %316 : vector<8xf32> to vector<8x1xf32>
    %318 = arith.mulf %315, %311 : vector<8x128xf32>
    %cst_95 = arith.constant dense<0.000000e+00> : vector<8xf32>
    %319 = vector.multi_reduction <add>, %318, %cst_95 [1] : vector<8x128xf32> to vector<8xf32>
    %320 = vector.shape_cast %319 : vector<8xf32> to vector<8x1xf32>
    %cst_96 = arith.constant 3.125000e-02 : f32
    %321 = vector.broadcast %cst_96 : f32 to vector<8x1xf32>
    %322 = arith.mulf %317, %321 : vector<8x1xf32>
    %cst_97 = arith.constant 3.125000e-02 : f32
    %323 = vector.broadcast %cst_97 : f32 to vector<8x1xf32>
    %324 = arith.mulf %320, %323 : vector<8x1xf32>
    %325 = arith.mulf %322, %322 : vector<8x1xf32>
    %326 = arith.subf %324, %325 : vector<8x1xf32>
    %cst_98 = arith.constant 9.99999974E-6 : f32
    %327 = vector.broadcast %cst_98 : f32 to vector<8x1xf32>
    %328 = arith.addf %326, %327 : vector<8x1xf32>
    %329 = math.rsqrt %328 : vector<8x1xf32>
    %330 = vector.broadcast %322 : vector<8x1xf32> to vector<8x128xf32>
    %331 = arith.subf %311, %330 : vector<8x128xf32>
    %332 = vector.broadcast %329 : vector<8x1xf32> to vector<8x128xf32>
    %333 = arith.mulf %331, %332 : vector<8x128xf32>
    %334 = vector.broadcast %312 : vector<1x128xf32> to vector<8x128xf32>
    %335 = arith.mulf %333, %334 : vector<8x128xf32>
    %336 = vector.broadcast %313 : vector<1x128xf32> to vector<8x128xf32>
    %337 = arith.addf %335, %336 : vector<8x128xf32>
    %c600 = arith.constant 600 : index
    %c0_99 = arith.constant 0 : index
    %338 = vector.load %arg4[%c600, %c0_99] : memref<728x128xf32, #tpu.memory_space<vmem>>, vector<128x128xf32>
    %cst_100 = arith.constant dense<0.000000e+00> : vector<8x128xf32>
    %339 = tpu.matmul %337, %338, %cst_100 {dimension_numbers = #tpu.dot_dimension_numbers<[1], [0], [0], [1], [0, 0, 1, 1], [], []>} : vector<8x128xf32>, vector<128x128xf32>, vector<8x128xf32> -> vector<8x128xf32>
    %c19 = arith.constant 19 : index
    %c0_101 = arith.constant 0 : index
    %340 = vector.load %arg4[%c19, %c0_101] : memref<728x128xf32, #tpu.memory_space<vmem>>, vector<1x128xf32>
    %341 = vector.broadcast %340 : vector<1x128xf32> to vector<8x128xf32>
    %342 = arith.addf %339, %341 : vector<8x128xf32>
    %343 = arith.addf %342, %220 : vector<8x128xf32>
    %c0_102 = arith.constant 0 : index
    %c0_103 = arith.constant 0 : index
    %c0_104 = arith.constant 0 : index
    %344 = vector.load %arg5[%c0_102, %c0_103, %c0_104] : memref<1x8x128xf32, #tpu.memory_space<vmem>>, vector<1x8x128xf32>
    %345 = vector.shape_cast %344 : vector<1x8x128xf32> to vector<8x128xf32>
    %346 = vector.shape_cast %343 : vector<8x128xf32> to vector<1x8x128xf32>
    tpu.vector_store %arg5[%c0_102, %c0_103, %c0_104], %346 {strides = array<i32>} : memref<1x8x128xf32, #tpu.memory_space<vmem>>, vector<1x8x128xf32>,
    return
  }
  func.func @transform_0(%arg0: i32, %arg1: i32) -> (i32, i32, i32) {
    %c0_i32 = arith.constant 0 : i32
    %c0_i32_0 = arith.constant 0 : i32
    return %arg1, %arg0, %c0_i32 : i32, i32, i32
  }
  func.func @transform_1(%arg0: i32, %arg1: i32) -> (i32, i32) {
    %c0_i32 = arith.constant 0 : i32
    %c0_i32_0 = arith.constant 0 : i32
    return %arg0, %c0_i32 : i32, i32
  }
  func.func @transform_2(%arg0: i32, %arg1: i32) -> (i32, i32) {
    %c0_i32 = arith.constant 0 : i32
    %c0_i32_0 = arith.constant 0 : i32
    %c0_i32_1 = arith.constant 0 : i32
    return %c0_i32, %c0_i32_0 : i32, i32
  }
  func.func @transform_3(%arg0: i32, %arg1: i32) -> (i32, i32, i32) {
    %c0_i32 = arith.constant 0 : i32
    %c0_i32_0 = arith.constant 0 : i32
    return %arg1, %arg0, %c0_i32 : i32, i32, i32
  }
}

</mosaic_0001>

<llo_original>
// kernel: tpu_custom_call.1
$region0: #{tpu_custom_call.1}
  #allocation0 [shape = 'u32[]', space=smem, size = 0x4, offset = 0x4, fixed_abs, tag = 'smem constant byte address 0x4 - core index']
  #allocation1 [shape = 'u32[144,128]{1,0:T(1,128)}', space=vmem, size = 0x12000, scoped, tag = 'internal scratch']
  #allocation2 [shape = 'f32[8,128]{1,0:T(8,128)}', space=vmem, size = 0x1000, scoped, tag = 'scratch operand']
  %s0 = inlined_call_operand.hbm [shape: f32[1,8,128], index: 0, kind: input, shape index: {}]
  %s1 = inlined_call_operand.hbm [shape: f32[8,128], index: 1, kind: input, shape index: {}]
  %s2 = inlined_call_operand.hbm [shape: f32[728,128], index: 2, kind: input, shape index: {}]
  %s3 = inlined_call_operand.hbm [shape: f32[1,8,128], index: 3, kind: output, shape index: {}]
  %s4 = sld [smem:[#allocation0]]
  $region38: #{tpu_custom_call.1} parent=0
    _
  %s6 = ssub.s32 1, %s4
  %s7 = scalar_select 0, %s6, %s4
  $region1: #{tpu_custom_call.1} parent=0
    #allocation3 [shape = 'u8[4096]{0}', space=vmem, size = 0x1000, scoped, tag = 'input window, operand 0, single buffered']
    #allocation4 [shape = 's32[1]{0}', space=sflag, size = 0x4, scoped, tag = 'scoped memory for tpu_custom_call.1']
    #allocation5 [shape = 's32[1]{0}', space=sflag, size = 0x4, scoped, tag = 'scoped memory for tpu_custom_call.1']
    #allocation6 [shape = 'u8[4096]{0}', space=vmem, size = 0x1000, scoped, tag = 'input window, operand 1, single buffered']
    #allocation7 [shape = 's32[1]{0}', space=sflag, size = 0x4, scoped, tag = 'scoped memory for tpu_custom_call.1']
    #allocation8 [shape = 'u8[372736]{0}', space=vmem, size = 0x5b000, scoped, tag = 'input window, operand 2, single buffered']
    #allocation9 [shape = 'u8[4096]{0}', space=vmem, size = 0x1000, scoped, tag = 'output window, operand 0, single buffered']
    %8 = vsyncpa [#allocation4], 0
    %9 = vsyncpa [#allocation7], 0
    %10 = vsyncpa [#allocation5], 0
    // Predicated region
    $region2: #{tpu_custom_call.1} parent=1 // pred_check
      _
    $region3: #{tpu_custom_call.1} parent=1 // pred_check_branch
      %12 = sbr.rel (0) target = $region5
    $region4: #{tpu_custom_call.1} parent=1 // pred_region
      %s14 = ssub.s32 128, 128
      %15 = vsyncadd [#allocation4], %s14
      %s17 = sshll.u32 [#allocation3], 4
      %s18 = int_to_ptr.vmem [resolvable:$true] %s17
      %20 = dma.hbm_to_vmem [thread:$0]  %s0, 128, %s18, [#allocation4]
    $region5: #{tpu_custom_call.1} parent=1 // pred_fallthru
      _
    // Predicated region
    $region6: #{tpu_custom_call.1} parent=1 // pred_check
      _
    $region7: #{tpu_custom_call.1} parent=1 // pred_check_branch
      %22 = sbr.rel (0) target = $region9
    $region8: #{tpu_custom_call.1} parent=1 // pred_region
      %s24 = ssub.s32 128, 128
      %25 = vsyncadd [#allocation7], %s24
      %s27 = sshll.u32 [#allocation6], 4
      %s28 = int_to_ptr.vmem [resolvable:$true] %s27
      %30 = dma.hbm_to_vmem [thread:$0]  %s1, 128, %s28, [#allocation7]
    $region9: #{tpu_custom_call.1} parent=1 // pred_fallthru
      _
    // Predicated region
    $region10: #{tpu_custom_call.1} parent=1 // pred_check
      _
    $region11: #{tpu_custom_call.1} parent=1 // pred_check_branch
      %32 = sbr.rel (0) target = $region13
    $region12: #{tpu_custom_call.1} parent=1 // pred_region
      %s34 = ssub.s32 11648, 11648
      %35 = vsyncadd [#allocation7], %s34
      %s36 = sshll.u32 [#allocation8], 4
      %s37 = int_to_ptr.vmem [resolvable:$true] %s36
      %42 = dma.hbm_to_vmem [thread:$0]  %s2, 11648, %s37, [#allocation7], 128, 128, 8
    $region13: #{tpu_custom_call.1} parent=1 // pred_fallthru
      _
    // Predicated region
    $region14: #{tpu_custom_call.1} parent=1 // pred_check
      _
    $region15: #{tpu_custom_call.1} parent=1 // pred_check_branch
      %44 = sbr.rel (0) target = $region17
    $region16: #{tpu_custom_call.1} parent=1 // pred_region
      %45 = dma.done [#allocation4], 128
    $region17: #{tpu_custom_call.1} parent=1 // pred_fallthru
      _
    // Predicated region
    $region18: #{tpu_custom_call.1} parent=1 // pred_check
      _
    $region19: #{tpu_custom_call.1} parent=1 // pred_check_branch
      %47 = sbr.rel (0) target = $region21
    $region20: #{tpu_custom_call.1} parent=1 // pred_region
      %48 = dma.done [#allocation7], 128
    $region21: #{tpu_custom_call.1} parent=1 // pred_fallthru
      _
    // Predicated region
    $region22: #{tpu_custom_call.1} parent=1 // pred_check
      _
    $region23: #{tpu_custom_call.1} parent=1 // pred_check_branch
      %50 = sbr.rel (0) target = $region25
    $region24: #{tpu_custom_call.1} parent=1 // pred_region
      %51 = dma.done [#allocation7], 11648
    $region25: #{tpu_custom_call.1} parent=1 // pred_fallthru
      _
    %p52 = scmp.eq.s32.totalorder 0, 0
    // Predicated region
    $region26: #{tpu_custom_call.1} parent=1 // pred_check
      %p53 = pneg %p52
    $region27: #{tpu_custom_call.1} parent=1 // pred_check_branch
      %55 = sbr.rel (%p53) target = $region29
    $region28: #{tpu_custom_call.1} parent=1 // pred_region
      %v56 = vld [vmem:[#allocation6] sm:$0xff]
      %57 = vst [vmem:[#allocation2] sm:$0xff] %v56
    $region29: #{tpu_custom_call.1} parent=1 // pred_fallthru
      _
    %v58 = vld [vmem:[#allocation3] sm:$0xff]
    %v59 = vld [vmem:[#allocation8 + $0x14] sm:$0x1]
    %v60 = vld [vmem:[#allocation8 + $0x15] sm:$0x1]
    %v61 = vld [vmem:[#allocation8 + $0x16] sm:$0x1]
    %v62 = vld [vmem:[#allocation8 + $0x17] sm:$0x1]
    %v63 = vld [vmem:[#allocation8] sm:$0x1]
    %v64 = vld [vmem:[#allocation8 + $0x1] sm:$0x1]
    %v65 = vlaneseq
    %v66 = vshrl.u32 %v65, 7
    %v67 = vsub.s32 0, %v66
    %v68 = vrot.slane %v59, %v67
    %v69 = vmul.f32 %v58, %v68
    %v70 = vlaneseq
    %v71 = vshrl.u32 %v70, 7
    %v72 = vsub.s32 0, %v71
    %v73 = vrot.slane %v60, %v72
    %v74 = vmul.f32 %v58, %v73
    %75 = vadd.xlane.f32.xlu0 %v69
    %v76 = vpop.xlane.xlu0 %75
    %v77 = vmul.f32 %v69, %v58
    %78 = vadd.xlane.f32.xlu0 %v77
    %v79 = vpop.xlane.xlu0 %78
    %80 = vadd.xlane.f32.xlu0 %v74
    %v81 = vpop.xlane.xlu0 %80
    %v82 = vmul.f32 %v74, %v58
    %83 = vadd.xlane.f32.xlu0 %v82
    %v84 = vpop.xlane.xlu0 %83
    %v85 = vmul.f32 %v76, 0.25
    %v86 = vmul.f32 %v81, 0.0625
    %v87 = vmul.f32 %v79, 0.25
    %v88 = vmul.f32 %v85, %v85
    %v89 = vsub.f32 %v87, %v88
    %v90 = vadd.f32 %v89, 1e-05
    %v91 = vrsqrt.pop %v90
    %v92 = vmul.f32 %v84, 0.0625
    %v93 = vmul.f32 %v86, %v86
    %v94 = vsub.f32 %v92, %v93
    %v95 = vadd.f32 %v94, 1e-05
    %v96 = vrsqrt.pop %v95
    %v97 = vmul.f32 %v68, %v85
    %v98 = vmul.f32 %v73, %v86
    %v99 = vadd.f32 %v97, %v98
    %v100 = vmul.f32 %v68, %v91
    %v101 = vmul.f32 %v73, %v96
    %v102 = vadd.f32 %v100, %v101
    %v103 = vsub.f32 %v58, %v99
    %v104 = vmul.f32 %v103, %v102
    %v105 = vlaneseq
    %v106 = vshrl.u32 %v105, 7
    %v107 = vsub.s32 0, %v106
    %v108 = vrot.slane %v63, %v107
    %v109 = vmul.f32 %v104, %v108
    %v110 = vlaneseq
    %v111 = vshrl.u32 %v110, 7
    %v112 = vsub.s32 0, %v111
    %v113 = vrot.slane %v64, %v112
    %v114 = vadd.f32 %v109, %v113
    %v115 = vld [vmem:[#allocation8 + $0x18] sm:$0xff]
    %v116 = vld [vmem:[#allocation8 + $0x20] sm:$0xff]
    %v117 = vld [vmem:[#allocation8 + $0x28] sm:$0xff]
    %v118 = vld [vmem:[#allocation8 + $0x30] sm:$0xff]
    %v119 = vld [vmem:[#allocation8 + $0x38] sm:$0xff]
    %v120 = vld [vmem:[#allocation8 + $0x40] sm:$0xff]
    %v121 = vld [vmem:[#allocation8 + $0x48] sm:$0xff]
    %v122 = vld [vmem:[#allocation8 + $0x50] sm:$0xff]
    %v123 = vld [vmem:[#allocation8 + $0x58] sm:$0xff]
    %v124 = vld [vmem:[#allocation8 + $0x60] sm:$0xff]
    %v125 = vld [vmem:[#allocation8 + $0x68] sm:$0xff]
    %v126 = vld [vmem:[#allocation8 + $0x70] sm:$0xff]
    %v127 = vld [vmem:[#allocation8 + $0x78] sm:$0xff]
    %v128 = vld [vmem:[#allocation8 + $0x80] sm:$0xff]
    %v129 = vld [vmem:[#allocation8 + $0x88] sm:$0xff]
    %v130 = vld [vmem:[#allocation8 + $0x90] sm:$0xff]
    %v131 = vld [vmem:[#allocation8 + $0x2] sm:$0x1]
    %v132 = vlaneseq
    %v133 = vshrl.u32 %v132, 7
    %v134 = vsub.s32 0, %v133
    %v135 = vrot.slane %v131, %v134
    %136 = vmatprep.subr.mxu0 0.0
    %137 = vmatpush1.msra.mxu0 %v115
    %138 = vmatprep.subr.mxu0 0.0
    %139 = vmatpush1.msra.mxu0 %v116
    %140 = vmatprep.subr.mxu0 0.0
    %141 = vmatpush1.msra.mxu0 %v117
    %142 = vmatprep.subr.mxu0 0.0
    %143 = vmatpush1.msra.mxu0 %v118
    %144 = vmatprep.subr.mxu0 0.0
    %145 = vmatpush1.msra.mxu0 %v119
    %146 = vmatprep.subr.mxu0 0.0
    %147 = vmatpush1.msra.mxu0 %v120
    %148 = vmatprep.subr.mxu0 0.0
    %149 = vmatpush1.msra.mxu0 %v121
    %150 = vmatprep.subr.mxu0 0.0
    %151 = vmatpush1.msra.mxu0 %v122
    %152 = vmatprep.subr.mxu0 0.0
    %153 = vmatpush1.msra.mxu0 %v123
    %154 = vmatprep.subr.mxu0 0.0
    %155 = vmatpush1.msra.mxu0 %v124
    %156 = vmatprep.subr.mxu0 0.0
    %157 = vmatpush1.msra.mxu0 %v125
    %158 = vmatprep.subr.mxu0 0.0
    %159 = vmatpush1.msra.mxu0 %v126
    %160 = vmatprep.subr.mxu0 0.0
    %161 = vmatpush1.msra.mxu0 %v127
    %162 = vmatprep.subr.mxu0 0.0
    %163 = vmatpush1.msra.mxu0 %v128
    %164 = vmatprep.subr.mxu0 0.0
    %165 = vmatpush1.msra.mxu0 %v129
    %166 = vmatprep.subr.mxu0 0.0
    %167 = vmatpush1.msra.mxu0 %v130
    %168 = vmatprep.subr.mxu0 0.0
    %169 = vmatpush1.msra.mxu0 0.0
    %170 = vmatprep.subr.mxu0 0.0
    %171 = vmatpush1.msra.mxu0 0.0
    %172 = vmatprep.subr.mxu0 0.0
    %173 = vmatpush1.msra.mxu0 0.0
    %174 = vmatprep.subr.mxu0 0.0
    %175 = vmatpush1.msra.mxu0 0.0
    %176 = vmatprep.subr.mxu0 0.0
    %177 = vmatpush1.msra.mxu0 0.0
    %178 = vmatprep.subr.mxu0 0.0
    %179 = vmatpush1.msra.mxu0 0.0
    %180 = vmatprep.subr.mxu0 0.0
    %181 = vmatpush1.msra.mxu0 0.0
    %182 = vmatprep.subr.mxu0 0.0
    %183 = vmatpush1.msra.mxu0 0.0
    %184 = vmatprep.subr.mxu0 0.0
    %185 = vmatpush1.msra.mxu0 0.0
    %186 = vmatprep.subr.mxu0 0.0
    %187 = vmatpush1.msra.mxu0 0.0
    %188 = vmatprep.subr.mxu0 0.0
    %189 = vmatpush1.msra.mxu0 0.0
    %190 = vmatprep.subr.mxu0 0.0
    %191 = vmatpush1.msra.mxu0 0.0
    %192 = vmatprep.subr.mxu0 0.0
    %193 = vmatpush1.msra.mxu0 0.0
    %194 = vmatprep.subr.mxu0 0.0
    %195 = vmatpush1.msra.mxu0 0.0
    %196 = vmatprep.subr.mxu0 0.0
    %197 = vmatpush1.msra.mxu0 0.0
    %198 = vmatprep.subr.mxu0 0.0
    %199 = vmatpush1.msra.mxu0 0.0
    %200 = vmatprep.mubr.f32.mxu0 0.0
    %201 = vmatmul.mubr.f32.gmra.mrb[0].mxu0 %v114
    %v202 = vpop.f32.mrb[0].mxu0
    %v203 = vadd.f32 %v135, %v202
    %v204 = vpop.f32.mrb[0].mxu0
    %205 = vdwg.mxu0
    %v206 = vmax.f32 %v203, 0.0
    %v207 = vld [vmem:[#allocation8 + $0x3] sm:$0x1]
    %v208 = vld [vmem:[#allocation8 + $0x4] sm:$0x1]
    %v209 = vlaneseq
    %v210 = vshrl.u32 %v209, 7
    %v211 = vsub.s32 0, %v210
    %v212 = vrot.slane %v61, %v211
    %v213 = vmul.f32 %v206, %v212
    %v214 = vlaneseq
    %v215 = vshrl.u32 %v214, 7
    %v216 = vsub.s32 0, %v215
    %v217 = vrot.slane %v62, %v216
    %v218 = vmul.f32 %v206, %v217
    %219 = vadd.xlane.f32.xlu0 %v213
    %v220 = vpop.xlane.xlu0 %219
    %v221 = vmul.f32 %v213, %v206
    %222 = vadd.xlane.f32.xlu0 %v221
    %v223 = vpop.xlane.xlu0 %222
    %224 = vadd.xlane.f32.xlu0 %v218
    %v225 = vpop.xlane.xlu0 %224
    %v226 = vmul.f32 %v218, %v206
    %227 = vadd.xlane.f32.xlu0 %v226
    %v228 = vpop.xlane.xlu0 %227
    %v229 = vmul.f32 %v220, 0.03125
    %v230 = vmul.f32 %v225, 0.03125
    %v231 = vmul.f32 %v223, 0.03125
    %v232 = vmul.f32 %v229, %v229
    %v233 = vsub.f32 %v231, %v232
    %v234 = vadd.f32 %v233, 1e-05
    %v235 = vrsqrt.pop %v234
    %v236 = vmul.f32 %v228, 0.03125
    %v237 = vmul.f32 %v230, %v230
    %v238 = vsub.f32 %v236, %v237
    %v239 = vadd.f32 %v238, 1e-05
    %v240 = vrsqrt.pop %v239
    %v241 = vmul.f32 %v212, %v229
    %v242 = vmul.f32 %v217, %v230
    %v243 = vadd.f32 %v241, %v242
    %v244 = vmul.f32 %v212, %v235
    %v245 = vmul.f32 %v217, %v240
    %v246 = vadd.f32 %v244, %v245
    %v247 = vsub.f32 %v206, %v243
    %v248 = vmul.f32 %v247, %v246
    %v249 = vlaneseq
    %v250 = vshrl.u32 %v249, 7
    %v251 = vsub.s32 0, %v250
    %v252 = vrot.slane %v207, %v251
    %v253 = vmul.f32 %v248, %v252
    %v254 = vlaneseq
    %v255 = vshrl.u32 %v254, 7
    %v256 = vsub.s32 0, %v255
    %v257 = vrot.slane %v208, %v256
    %v258 = vadd.f32 %v253, %v257
    %v259 = vld [vmem:[#allocation8 + $0x98] sm:$0xff]
    %v260 = vld [vmem:[#allocation8 + $0xa0] sm:$0xff]
    %v261 = vld [vmem:[#allocation8 + $0xa8] sm:$0xff]
    %v262 = vld [vmem:[#allocation8 + $0xb0] sm:$0xff]
    %v263 = vld [vmem:[#allocation8 + $0xb8] sm:$0xff]
    %v264 = vld [vmem:[#allocation8 + $0xc0] sm:$0xff]
    %v265 = vld [vmem:[#allocation8 + $0xc8] sm:$0xff]
    %v266 = vld [vmem:[#allocation8 + $0xd0] sm:$0xff]
    %v267 = vld [vmem:[#allocation8 + $0xd8] sm:$0xff]
    %v268 = vld [vmem:[#allocation8 + $0xe0] sm:$0xff]
    %v269 = vld [vmem:[#allocation8 + $0xe8] sm:$0xff]
    %v270 = vld [vmem:[#allocation8 + $0xf0] sm:$0xff]
    %v271 = vld [vmem:[#allocation8 + $0xf8] sm:$0xff]
    %v272 = vld [vmem:[#allocation8 + $0x100] sm:$0xff]
    %v273 = vld [vmem:[#allocation8 + $0x108] sm:$0xff]
    %v274 = vld [vmem:[#allocation8 + $0x110] sm:$0xff]
    %v275 = vld [vmem:[#allocation8 + $0x5] sm:$0x1]
    %v276 = vlaneseq
    %v277 = vshrl.u32 %v276, 7
    %v278 = vsub.s32 0, %v277
    %v279 = vrot.slane %v275, %v278
    %280 = vmatprep.subr.mxu0 0.0
    %281 = vmatpush1.msra.mxu0 %v259
    %282 = vmatprep.subr.mxu0 0.0
    %283 = vmatpush1.msra.mxu0 %v260
    %284 = vmatprep.subr.mxu0 0.0
    %285 = vmatpush1.msra.mxu0 %v261
    %286 = vmatprep.subr.mxu0 0.0
    %287 = vmatpush1.msra.mxu0 %v262
    %288 = vmatprep.subr.mxu0 0.0
    %289 = vmatpush1.msra.mxu0 %v263
    %290 = vmatprep.subr.mxu0 0.0
    %291 = vmatpush1.msra.mxu0 %v264
    %292 = vmatprep.subr.mxu0 0.0
    %293 = vmatpush1.msra.mxu0 %v265
    %294 = vmatprep.subr.mxu0 0.0
    %295 = vmatpush1.msra.mxu0 %v266
    %296 = vmatprep.subr.mxu0 0.0
    %297 = vmatpush1.msra.mxu0 %v267
    %298 = vmatprep.subr.mxu0 0.0
    %299 = vmatpush1.msra.mxu0 %v268
    %300 = vmatprep.subr.mxu0 0.0
    %301 = vmatpush1.msra.mxu0 %v269
    %302 = vmatprep.subr.mxu0 0.0
    %303 = vmatpush1.msra.mxu0 %v270
    %304 = vmatprep.subr.mxu0 0.0
    %305 = vmatpush1.msra.mxu0 %v271
    %306 = vmatprep.subr.mxu0 0.0
    %307 = vmatpush1.msra.mxu0 %v272
    %308 = vmatprep.subr.mxu0 0.0
    %309 = vmatpush1.msra.mxu0 %v273
    %310 = vmatprep.subr.mxu0 0.0
    %311 = vmatpush1.msra.mxu0 %v274
    %312 = vmatprep.subr.mxu0 0.0
    %313 = vmatpush1.msra.mxu0 0.0
    %314 = vmatprep.subr.mxu0 0.0
    %315 = vmatpush1.msra.mxu0 0.0
    %316 = vmatprep.subr.mxu0 0.0
    %317 = vmatpush1.msra.mxu0 0.0
    %318 = vmatprep.subr.mxu0 0.0
    %319 = vmatpush1.msra.mxu0 0.0
    %320 = vmatprep.subr.mxu0 0.0
    %321 = vmatpush1.msra.mxu0 0.0
    %322 = vmatprep.subr.mxu0 0.0
    %323 = vmatpush1.msra.mxu0 0.0
    %324 = vmatprep.subr.mxu0 0.0
    %325 = vmatpush1.msra.mxu0 0.0
    %326 = vmatprep.subr.mxu0 0.0
    %327 = vmatpush1.msra.mxu0 0.0
    %328 = vmatprep.subr.mxu0 0.0
    %329 = vmatpush1.msra.mxu0 0.0
    %330 = vmatprep.subr.mxu0 0.0
    %331 = vmatpush1.msra.mxu0 0.0
    %332 = vmatprep.subr.mxu0 0.0
    %333 = vmatpush1.msra.mxu0 0.0
    %334 = vmatprep.subr.mxu0 0.0
    %335 = vmatpush1.msra.mxu0 0.0
    %336 = vmatprep.subr.mxu0 0.0
    %337 = vmatpush1.msra.mxu0 0.0
    %338 = vmatprep.subr.mxu0 0.0
    %339 = vmatpush1.msra.mxu0 0.0
    %340 = vmatprep.subr.mxu0 0.0
    %341 = vmatpush1.msra.mxu0 0.0
    %342 = vmatprep.subr.mxu0 0.0
    %343 = vmatpush1.msra.mxu0 0.0
    %344 = vmatprep.mubr.f32.mxu0 0.0
    %345 = vmatmul.mubr.f32.gmra.mrb[0].mxu0 %v258
    %v346 = vpop.f32.mrb[0].mxu0
    %v347 = vadd.f32 %v279, %v346
    %v348 = vpop.f32.mrb[0].mxu0
    %349 = vdwg.mxu0
    %v350 = vmax.f32 %v347, 0.0
    %v351 = vld [vmem:[#allocation8 + $0x6] sm:$0x1]
    %v352 = vld [vmem:[#allocation8 + $0x7] sm:$0x1]
    %v353 = vmul.f32 %v350, %v212
    %v354 = vmul.f32 %v350, %v217
    %355 = vadd.xlane.f32.xlu0 %v353
    %v356 = vpop.xlane.xlu0 %355
    %v357 = vmul.f32 %v353, %v350
    %358 = vadd.xlane.f32.xlu0 %v357
    %v359 = vpop.xlane.xlu0 %358
    %360 = vadd.xlane.f32.xlu0 %v354
    %v361 = vpop.xlane.xlu0 %360
    %v362 = vmul.f32 %v354, %v350
    %363 = vadd.xlane.f32.xlu0 %v362
    %v364 = vpop.xlane.xlu0 %363
    %v365 = vmul.f32 %v356, 0.03125
    %v366 = vmul.f32 %v361, 0.03125
    %v367 = vmul.f32 %v359, 0.03125
    %v368 = vmul.f32 %v365, %v365
    %v369 = vsub.f32 %v367, %v368
    %v370 = vadd.f32 %v369, 1e-05
    %v371 = vrsqrt.pop %v370
    %v372 = vmul.f32 %v364, 0.03125
    %v373 = vmul.f32 %v366, %v366
    %v374 = vsub.f32 %v372, %v373
    %v375 = vadd.f32 %v374, 1e-05
    %v376 = vrsqrt.pop %v375
    %v377 = vmul.f32 %v212, %v365
    %v378 = vmul.f32 %v217, %v366
    %v379 = vadd.f32 %v377, %v378
    %v380 = vmul.f32 %v212, %v371
    %v381 = vmul.f32 %v217, %v376
    %v382 = vadd.f32 %v380, %v381
    %v383 = vsub.f32 %v350, %v379
    %v384 = vmul.f32 %v383, %v382
    %v385 = vlaneseq
    %v386 = vshrl.u32 %v385, 7
    %v387 = vsub.s32 0, %v386
    %v388 = vrot.slane %v351, %v387
    %v389 = vmul.f32 %v384, %v388
    %v390 = vlaneseq
    %v391 = vshrl.u32 %v390, 7
    %v392 = vsub.s32 0, %v391
    %v393 = vrot.slane %v352, %v392
    %v394 = vadd.f32 %v389, %v393
    %v395 = vld [vmem:[#allocation2] sm:$0xff]
    %397 = vset.pattern.permute.xlu0 127
    %398 = vperm.xlu0 %397, %v58
    %v399 = vpop.permute.xlu0 %398
    %v401 = vmul.f32 %v395, %v399
    %v402 = vadd.f32 %v394, %v401
    %v403 = vld [vmem:[#allocation8 + $0x118] sm:$0xff]
    %v404 = vld [vmem:[#allocation8 + $0x120] sm:$0xff]
    %v405 = vld [vmem:[#allocation8 + $0x128] sm:$0xff]
    %v406 = vld [vmem:[#allocation8 + $0x130] sm:$0xff]
    %v407 = vld [vmem:[#allocation8 + $0x138] sm:$0xff]
    %v408 = vld [vmem:[#allocation8 + $0x140] sm:$0xff]
    %v409 = vld [vmem:[#allocation8 + $0x148] sm:$0xff]
    %v410 = vld [vmem:[#allocation8 + $0x150] sm:$0xff]
    %v411 = vld [vmem:[#allocation8 + $0x158] sm:$0xff]
    %v412 = vld [vmem:[#allocation8 + $0x160] sm:$0xff]
    %v413 = vld [vmem:[#allocation8 + $0x168] sm:$0xff]
    %v414 = vld [vmem:[#allocation8 + $0x170] sm:$0xff]
    %v415 = vld [vmem:[#allocation8 + $0x178] sm:$0xff]
    %v416 = vld [vmem:[#allocation8 + $0x180] sm:$0xff]
    %v417 = vld [vmem:[#allocation8 + $0x188] sm:$0xff]
    %v418 = vld [vmem:[#allocation8 + $0x190] sm:$0xff]
    %v419 = vld [vmem:[#allocation8 + $0x8] sm:$0x1]
    %v420 = vlaneseq
    %v421 = vshrl.u32 %v420, 7
    %v422 = vsub.s32 0, %v421
    %v423 = vrot.slane %v419, %v422
    %424 = vmatprep.subr.mxu0 0.0
    %425 = vmatpush1.msra.mxu0 %v403
    %426 = vmatprep.subr.mxu0 0.0
    %427 = vmatpush1.msra.mxu0 %v404
    %428 = vmatprep.subr.mxu0 0.0
    %429 = vmatpush1.msra.mxu0 %v405
    %430 = vmatprep.subr.mxu0 0.0
    %431 = vmatpush1.msra.mxu0 %v406
    %432 = vmatprep.subr.mxu0 0.0
    %433 = vmatpush1.msra.mxu0 %v407
    %434 = vmatprep.subr.mxu0 0.0
    %435 = vmatpush1.msra.mxu0 %v408
    %436 = vmatprep.subr.mxu0 0.0
    %437 = vmatpush1.msra.mxu0 %v409
    %438 = vmatprep.subr.mxu0 0.0
    %439 = vmatpush1.msra.mxu0 %v410
    %440 = vmatprep.subr.mxu0 0.0
    %441 = vmatpush1.msra.mxu0 %v411
    %442 = vmatprep.subr.mxu0 0.0
    %443 = vmatpush1.msra.mxu0 %v412
    %444 = vmatprep.subr.mxu0 0.0
    %445 = vmatpush1.msra.mxu0 %v413
    %446 = vmatprep.subr.mxu0 0.0
    %447 = vmatpush1.msra.mxu0 %v414
    %448 = vmatprep.subr.mxu0 0.0
    %449 = vmatpush1.msra.mxu0 %v415
    %450 = vmatprep.subr.mxu0 0.0
    %451 = vmatpush1.msra.mxu0 %v416
    %452 = vmatprep.subr.mxu0 0.0
    %453 = vmatpush1.msra.mxu0 %v417
    %454 = vmatprep.subr.mxu0 0.0
    %455 = vmatpush1.msra.mxu0 %v418
    %456 = vmatprep.subr.mxu0 0.0
    %457 = vmatpush1.msra.mxu0 0.0
    %458 = vmatprep.subr.mxu0 0.0
    %459 = vmatpush1.msra.mxu0 0.0
    %460 = vmatprep.subr.mxu0 0.0
    %461 = vmatpush1.msra.mxu0 0.0
    %462 = vmatprep.subr.mxu0 0.0
    %463 = vmatpush1.msra.mxu0 0.0
    %464 = vmatprep.subr.mxu0 0.0
    %465 = vmatpush1.msra.mxu0 0.0
    %466 = vmatprep.subr.mxu0 0.0
    %467 = vmatpush1.msra.mxu0 0.0
    %468 = vmatprep.subr.mxu0 0.0
    %469 = vmatpush1.msra.mxu0 0.0
    %470 = vmatprep.subr.mxu0 0.0
    %471 = vmatpush1.msra.mxu0 0.0
    %472 = vmatprep.subr.mxu0 0.0
    %473 = vmatpush1.msra.mxu0 0.0
    %474 = vmatprep.subr.mxu0 0.0
    %475 = vmatpush1.msra.mxu0 0.0
    %476 = vmatprep.subr.mxu0 0.0
    %477 = vmatpush1.msra.mxu0 0.0
    %478 = vmatprep.subr.mxu0 0.0
    %479 = vmatpush1.msra.mxu0 0.0
    %480 = vmatprep.subr.mxu0 0.0
    %481 = vmatpush1.msra.mxu0 0.0
    %482 = vmatprep.subr.mxu0 0.0
    %483 = vmatpush1.msra.mxu0 0.0
    %484 = vmatprep.subr.mxu0 0.0
    %485 = vmatpush1.msra.mxu0 0.0
    %486 = vmatprep.subr.mxu0 0.0
    %487 = vmatpush1.msra.mxu0 0.0
    %488 = vmatprep.mubr.f32.mxu0 0.0
    %489 = vmatmul.mubr.f32.gmra.mrb[0].mxu0 %v402
    %v490 = vpop.f32.mrb[0].mxu0
    %v491 = vadd.f32 %v423, %v490
    %v492 = vpop.f32.mrb[0].mxu0
    %493 = vdwg.mxu0
    %v494 = vxor.u32 %v491, 2147483648
    %v495 = vmul.f32 %v494, 1.442695
    %v496 = vpow.pop %v495
    %v497 = vadd.f32 %v496, 1.0
    %v498 = vrcp.pop %v497
    %v499 = vmul.f32 1.0, %v498
    %501 = vrot.lane.b32.xlu0 %v491, 32
    %v502 = vpop.permute.xlu0 %501
    %v504 = vmul.f32 %v499, %v502
    %506 = vrot.lane.b32.xlu0 %v504, 64
    %v507 = vpop.permute.xlu0 %506
    %v509 = vadd.f32 %v491, %v507
    %v510 = vtanh.pop %v509
    %v511 = vsub.f32 1.0, %v499
    %513 = vrot.lane.b32.xlu0 %v510, 96
    %v514 = vpop.permute.xlu0 %513
    %v516 = vmul.f32 %v511, %v514
    %518 = vrot.lane.b32.xlu0 %v401, 96
    %v519 = vpop.permute.xlu0 %518
    %v521 = vmul.f32 %v499, %v519
    %v522 = vadd.f32 %v516, %v521
    %524 = vrot.lane.b32.xlu0 %v522, 32
    %v525 = vpop.permute.xlu0 %524
    %vm527 = vcmask 523264
    %v528 = vsel %vm527, 0.0, %v525
    %vm529 = vcmask 785408
    %v530 = vsel %vm529, %v528, 0.0
    %531 = vst [vmem:[#allocation2] sm:$0xff] %v530
    %v532 = vld [vmem:[#allocation8 + $0x9] sm:$0x1]
    %v533 = vld [vmem:[#allocation8 + $0xa] sm:$0x1]
    %534 = vrot.lane.b32.xlu0 %v522, 96
    %v535 = vpop.permute.xlu0 %534
    %vm537 = vcmask 261120
    %v538 = vsel %vm537, %v535, 0.0
    %539 = vadd.xlane.f32.xlu0 %v538
    %v540 = vpop.xlane.xlu0 %539
    %v541 = vmul.f32 %v522, %v522
    %543 = vrot.lane.b32.xlu0 %v541, 96
    %v544 = vpop.permute.xlu0 %543
    %v546 = vsel %vm537, %v544, 0.0
    %547 = vadd.xlane.f32.xlu0 %v546
    %v548 = vpop.xlane.xlu0 %547
    %v549 = vmul.f32 %v540, 0.03125
    %v550 = vmul.f32 %v548, 0.03125
    %v551 = vmul.f32 %v549, %v549
    %v552 = vsub.f32 %v550, %v551
    %v553 = vadd.f32 %v552, 1e-05
    %v554 = vrsqrt.pop %v553
    %v555 = vsub.f32 %v522, %v549
    %v556 = vmul.f32 %v555, %v554
    %v557 = vlaneseq
    %v558 = vshrl.u32 %v557, 7
    %v559 = vsub.s32 0, %v558
    %v560 = vrot.slane %v532, %v559
    %562 = vrot.lane.b32.xlu0 %v560, 32
    %v563 = vpop.permute.xlu0 %562
    %v565 = vmul.f32 %v556, %v563
    %v566 = vlaneseq
    %v567 = vshrl.u32 %v566, 7
    %v568 = vsub.s32 0, %v567
    %v569 = vrot.slane %v533, %v568
    %571 = vrot.lane.b32.xlu0 %v569, 32
    %v572 = vpop.permute.xlu0 %571
    %v574 = vadd.f32 %v565, %v572
    %576 = vrot.lane.b32.xlu0 %v574, 96
    %v577 = vpop.permute.xlu0 %576
    %v579 = vsel %vm537, %v577, %v394
    %v580 = vld [vmem:[#allocation8 + $0xb] sm:$0x1]
    %v581 = vld [vmem:[#allocation8 + $0xc] sm:$0x1]
    %v582 = vsel %vm527, %v579, 0.0
    %583 = vadd.xlane.f32.xlu0 %v582
    %v584 = vpop.xlane.xlu0 %583
    %v585 = vmul.f32 %v579, %v579
    %v586 = vsel %vm527, %v585, 0.0
    %587 = vadd.xlane.f32.xlu0 %v586
    %v588 = vpop.xlane.xlu0 %587
    %v589 = vmul.f32 %v584, 0.015625
    %v590 = vmul.f32 %v588, 0.015625
    %v591 = vmul.f32 %v589, %v589
    %v592 = vsub.f32 %v590, %v591
    %v593 = vadd.f32 %v592, 1e-05
    %v594 = vrsqrt.pop %v593
    %v595 = vsub.f32 %v579, %v589
    %v596 = vmul.f32 %v595, %v594
    %v597 = vlaneseq
    %v598 = vshrl.u32 %v597, 7
    %v599 = vsub.s32 0, %v598
    %v600 = vrot.slane %v580, %v599
    %v601 = vmul.f32 %v596, %v600
    %v602 = vlaneseq
    %v603 = vshrl.u32 %v602, 7
    %v604 = vsub.s32 0, %v603
    %v605 = vrot.slane %v581, %v604
    %v606 = vadd.f32 %v601, %v605
    %v607 = vld [vmem:[#allocation8 + $0x198] sm:$0xff]
    %v608 = vld [vmem:[#allocation8 + $0x1a0] sm:$0xff]
    %v609 = vld [vmem:[#allocation8 + $0x1a8] sm:$0xff]
    %v610 = vld [vmem:[#allocation8 + $0x1b0] sm:$0xff]
    %v611 = vld [vmem:[#allocation8 + $0x1b8] sm:$0xff]
    %v612 = vld [vmem:[#allocation8 + $0x1c0] sm:$0xff]
    %v613 = vld [vmem:[#allocation8 + $0x1c8] sm:$0xff]
    %v614 = vld [vmem:[#allocation8 + $0x1d0] sm:$0xff]
    %v615 = vld [vmem:[#allocation8 + $0xd] sm:$0x1]
    %v616 = vlaneseq
    %v617 = vshrl.u32 %v616, 7
    %v618 = vsub.s32 0, %v617
    %v619 = vrot.slane %v615, %v618
    %v621 = vsel %vm527, %v606, 0
    %623 = vmatprep.subr.mxu0 0.0
    %624 = vmatpush1.msra.mxu0 %v607
    %625 = vmatprep.subr.mxu0 0.0
    %626 = vmatpush1.msra.mxu0 %v608
    %627 = vmatprep.subr.mxu0 0.0
    %628 = vmatpush1.msra.mxu0 %v609
    %629 = vmatprep.subr.mxu0 0.0
    %630 = vmatpush1.msra.mxu0 %v610
    %631 = vmatprep.subr.mxu0 0.0
    %632 = vmatpush1.msra.mxu0 %v611
    %633 = vmatprep.subr.mxu0 0.0
    %634 = vmatpush1.msra.mxu0 %v612
    %635 = vmatprep.subr.mxu0 0.0
    %636 = vmatpush1.msra.mxu0 %v613
    %637 = vmatprep.subr.mxu0 0.0
    %638 = vmatpush1.msra.mxu0 %v614
    %639 = vmatprep.subr.mxu0 0.0
    %640 = vmatpush1.msra.mxu0 0.0
    %641 = vmatprep.subr.mxu0 0.0
    %642 = vmatpush1.msra.mxu0 0.0
    %643 = vmatprep.subr.mxu0 0.0
    %644 = vmatpush1.msra.mxu0 0.0
    %645 = vmatprep.subr.mxu0 0.0
    %646 = vmatpush1.msra.mxu0 0.0
    %647 = vmatprep.subr.mxu0 0.0
    %648 = vmatpush1.msra.mxu0 0.0
    %649 = vmatprep.subr.mxu0 0.0
    %650 = vmatpush1.msra.mxu0 0.0
    %651 = vmatprep.subr.mxu0 0.0
    %652 = vmatpush1.msra.mxu0 0.0
    %653 = vmatprep.subr.mxu0 0.0
    %654 = vmatpush1.msra.mxu0 0.0
    %655 = vmatprep.subr.mxu0 0.0
    %656 = vmatpush1.msra.mxu0 0.0
    %657 = vmatprep.subr.mxu0 0.0
    %658 = vmatpush1.msra.mxu0 0.0
    %659 = vmatprep.subr.mxu0 0.0
    %660 = vmatpush1.msra.mxu0 0.0
    %661 = vmatprep.subr.mxu0 0.0
    %662 = vmatpush1.msra.mxu0 0.0
    %663 = vmatprep.subr.mxu0 0.0
    %664 = vmatpush1.msra.mxu0 0.0
    %665 = vmatprep.subr.mxu0 0.0
    %666 = vmatpush1.msra.mxu0 0.0
    %667 = vmatprep.subr.mxu0 0.0
    %668 = vmatpush1.msra.mxu0 0.0
    %669 = vmatprep.subr.mxu0 0.0
    %670 = vmatpush1.msra.mxu0 0.0
    %671 = vmatprep.subr.mxu0 0.0
    %672 = vmatpush1.msra.mxu0 0.0
    %673 = vmatprep.subr.mxu0 0.0
    %674 = vmatpush1.msra.mxu0 0.0
    %675 = vmatprep.subr.mxu0 0.0
    %676 = vmatpush1.msra.mxu0 0.0
    %677 = vmatprep.subr.mxu0 0.0
    %678 = vmatpush1.msra.mxu0 0.0
    %679 = vmatprep.subr.mxu0 0.0
    %680 = vmatpush1.msra.mxu0 0.0
    %681 = vmatprep.subr.mxu0 0.0
    %682 = vmatpush1.msra.mxu0 0.0
    %683 = vmatprep.subr.mxu0 0.0
    %684 = vmatpush1.msra.mxu0 0.0
    %685 = vmatprep.subr.mxu0 0.0
    %686 = vmatpush1.msra.mxu0 0.0
    %687 = vmatprep.mubr.f32.mxu0 0.0
    %688 = vmatmul.mubr.f32.gmra.mrb[0].mxu0 %v621
    %v689 = vpop.f32.mrb[0].mxu0
    %v690 = vadd.f32 %v619, %v689
    %v691 = vpop.f32.mrb[0].mxu0
    %692 = vdwg.mxu0
    %v693 = vmax.f32 %v690, 0.0
    %v694 = vld [vmem:[#allocation8 + $0xe] sm:$0x1]
    %v695 = vld [vmem:[#allocation8 + $0xf] sm:$0x1]
    %v696 = vmul.f32 %v693, %v212
    %697 = vadd.xlane.f32.xlu0 %v696
    %v698 = vpop.xlane.xlu0 %697
    %v699 = vmul.f32 %v696, %v693
    %700 = vadd.xlane.f32.xlu0 %v699
    %v701 = vpop.xlane.xlu0 %700
    %v702 = vmul.f32 %v698, 0.03125
    %v703 = vmul.f32 %v701, 0.03125
    %v704 = vmul.f32 %v702, %v702
    %v705 = vsub.f32 %v703, %v704
    %v706 = vadd.f32 %v705, 1e-05
    %v707 = vrsqrt.pop %v706
    %v708 = vsub.f32 %v693, %v702
    %v709 = vmul.f32 %v708, %v707
    %v710 = vlaneseq
    %v711 = vshrl.u32 %v710, 7
    %v712 = vsub.s32 0, %v711
    %v713 = vrot.slane %v694, %v712
    %v714 = vmul.f32 %v709, %v713
    %v715 = vlaneseq
    %v716 = vshrl.u32 %v715, 7
    %v717 = vsub.s32 0, %v716
    %v718 = vrot.slane %v695, %v717
    %v719 = vadd.f32 %v714, %v718
    %v720 = vld [vmem:[#allocation8 + $0x1d8] sm:$0xff]
    %v721 = vld [vmem:[#allocation8 + $0x1e0] sm:$0xff]
    %v722 = vld [vmem:[#allocation8 + $0x1e8] sm:$0xff]
    %v723 = vld [vmem:[#allocation8 + $0x1f0] sm:$0xff]
    %v724 = vld [vmem:[#allocation8 + $0x1f8] sm:$0xff]
    %v725 = vld [vmem:[#allocation8 + $0x200] sm:$0xff]
    %v726 = vld [vmem:[#allocation8 + $0x208] sm:$0xff]
    %v727 = vld [vmem:[#allocation8 + $0x210] sm:$0xff]
    %v728 = vld [vmem:[#allocation8 + $0x218] sm:$0xff]
    %v729 = vld [vmem:[#allocation8 + $0x220] sm:$0xff]
    %v730 = vld [vmem:[#allocation8 + $0x228] sm:$0xff]
    %v731 = vld [vmem:[#allocation8 + $0x230] sm:$0xff]
    %v732 = vld [vmem:[#allocation8 + $0x238] sm:$0xff]
    %v733 = vld [vmem:[#allocation8 + $0x240] sm:$0xff]
    %v734 = vld [vmem:[#allocation8 + $0x248] sm:$0xff]
    %v735 = vld [vmem:[#allocation8 + $0x250] sm:$0xff]
    %v736 = vld [vmem:[#allocation8 + $0x10] sm:$0x1]
    %v737 = vlaneseq
    %v738 = vshrl.u32 %v737, 7
    %v739 = vsub.s32 0, %v738
    %v740 = vrot.slane %v736, %v739
    %741 = vmatprep.subr.mxu0 0.0
    %742 = vmatpush1.msra.mxu0 %v720
    %743 = vmatprep.subr.mxu0 0.0
    %744 = vmatpush1.msra.mxu0 %v721
    %745 = vmatprep.subr.mxu0 0.0
    %746 = vmatpush1.msra.mxu0 %v722
    %747 = vmatprep.subr.mxu0 0.0
    %748 = vmatpush1.msra.mxu0 %v723
    %749 = vmatprep.subr.mxu0 0.0
    %750 = vmatpush1.msra.mxu0 %v724
    %751 = vmatprep.subr.mxu0 0.0
    %752 = vmatpush1.msra.mxu0 %v725
    %753 = vmatprep.subr.mxu0 0.0
    %754 = vmatpush1.msra.mxu0 %v726
    %755 = vmatprep.subr.mxu0 0.0
    %756 = vmatpush1.msra.mxu0 %v727
    %757 = vmatprep.subr.mxu0 0.0
    %758 = vmatpush1.msra.mxu0 %v728
    %759 = vmatprep.subr.mxu0 0.0
    %760 = vmatpush1.msra.mxu0 %v729
    %761 = vmatprep.subr.mxu0 0.0
    %762 = vmatpush1.msra.mxu0 %v730
    %763 = vmatprep.subr.mxu0 0.0
    %764 = vmatpush1.msra.mxu0 %v731
    %765 = vmatprep.subr.mxu0 0.0
    %766 = vmatpush1.msra.mxu0 %v732
    %767 = vmatprep.subr.mxu0 0.0
    %768 = vmatpush1.msra.mxu0 %v733
    %769 = vmatprep.subr.mxu0 0.0
    %770 = vmatpush1.msra.mxu0 %v734
    %771 = vmatprep.subr.mxu0 0.0
    %772 = vmatpush1.msra.mxu0 %v735
    %773 = vmatprep.subr.mxu0 0.0
    %774 = vmatpush1.msra.mxu0 0.0
    %775 = vmatprep.subr.mxu0 0.0
    %776 = vmatpush1.msra.mxu0 0.0
    %777 = vmatprep.subr.mxu0 0.0
    %778 = vmatpush1.msra.mxu0 0.0
    %779 = vmatprep.subr.mxu0 0.0
    %780 = vmatpush1.msra.mxu0 0.0
    %781 = vmatprep.subr.mxu0 0.0
    %782 = vmatpush1.msra.mxu0 0.0
    %783 = vmatprep.subr.mxu0 0.0
    %784 = vmatpush1.msra.mxu0 0.0
    %785 = vmatprep.subr.mxu0 0.0
    %786 = vmatpush1.msra.mxu0 0.0
    %787 = vmatprep.subr.mxu0 0.0
    %788 = vmatpush1.msra.mxu0 0.0
    %789 = vmatprep.subr.mxu0 0.0
    %790 = vmatpush1.msra.mxu0 0.0
    %791 = vmatprep.subr.mxu0 0.0
    %792 = vmatpush1.msra.mxu0 0.0
    %793 = vmatprep.subr.mxu0 0.0
    %794 = vmatpush1.msra.mxu0 0.0
    %795 = vmatprep.subr.mxu0 0.0
    %796 = vmatpush1.msra.mxu0 0.0
    %797 = vmatprep.subr.mxu0 0.0
    %798 = vmatpush1.msra.mxu0 0.0
    %799 = vmatprep.subr.mxu0 0.0
    %800 = vmatpush1.msra.mxu0 0.0
    %801 = vmatprep.subr.mxu0 0.0
    %802 = vmatpush1.msra.mxu0 0.0
    %803 = vmatprep.subr.mxu0 0.0
    %804 = vmatpush1.msra.mxu0 0.0
    %805 = vmatprep.mubr.f32.mxu0 0.0
    %806 = vmatmul.mubr.f32.gmra.mrb[0].mxu0 %v719
    %v807 = vpop.f32.mrb[0].mxu0
    %v808 = vadd.f32 %v740, %v807
    %v809 = vpop.f32.mrb[0].mxu0
    %810 = vdwg.mxu0
    %v811 = vmax.f32 %v808, 0.0
    %v812 = vld [vmem:[#allocation8 + $0x11] sm:$0x1]
    %v813 = vld [vmem:[#allocation8 + $0x12] sm:$0x1]
    %v814 = vmul.f32 %v811, %v212
    %815 = vadd.xlane.f32.xlu0 %v814
    %v816 = vpop.xlane.xlu0 %815
    %v817 = vmul.f32 %v814, %v811
    %818 = vadd.xlane.f32.xlu0 %v817
    %v819 = vpop.xlane.xlu0 %818
    %v820 = vmul.f32 %v816, 0.03125
    %v821 = vmul.f32 %v819, 0.03125
    %v822 = vmul.f32 %v820, %v820
    %v823 = vsub.f32 %v821, %v822
    %v824 = vadd.f32 %v823, 1e-05
    %v825 = vrsqrt.pop %v824
    %v826 = vsub.f32 %v811, %v820
    %v827 = vmul.f32 %v826, %v825
    %v828 = vlaneseq
    %v829 = vshrl.u32 %v828, 7
    %v830 = vsub.s32 0, %v829
    %v831 = vrot.slane %v812, %v830
    %v832 = vmul.f32 %v827, %v831
    %v833 = vlaneseq
    %v834 = vshrl.u32 %v833, 7
    %v835 = vsub.s32 0, %v834
    %v836 = vrot.slane %v813, %v835
    %v837 = vadd.f32 %v832, %v836
    %v838 = vld [vmem:[#allocation8 + $0x258] sm:$0xff]
    %v839 = vld [vmem:[#allocation8 + $0x260] sm:$0xff]
    %v840 = vld [vmem:[#allocation8 + $0x268] sm:$0xff]
    %v841 = vld [vmem:[#allocation8 + $0x270] sm:$0xff]
    %v842 = vld [vmem:[#allocation8 + $0x278] sm:$0xff]
    %v843 = vld [vmem:[#allocation8 + $0x280] sm:$0xff]
    %v844 = vld [vmem:[#allocation8 + $0x288] sm:$0xff]
    %v845 = vld [vmem:[#allocation8 + $0x290] sm:$0xff]
    %v846 = vld [vmem:[#allocation8 + $0x298] sm:$0xff]
    %v847 = vld [vmem:[#allocation8 + $0x2a0] sm:$0xff]
    %v848 = vld [vmem:[#allocation8 + $0x2a8] sm:$0xff]
    %v849 = vld [vmem:[#allocation8 + $0x2b0] sm:$0xff]
    %v850 = vld [vmem:[#allocation8 + $0x2b8] sm:$0xff]
    %v851 = vld [vmem:[#allocation8 + $0x2c0] sm:$0xff]
    %v852 = vld [vmem:[#allocation8 + $0x2c8] sm:$0xff]
    %v853 = vld [vmem:[#allocation8 + $0x2d0] sm:$0xff]
    %v854 = vld [vmem:[#allocation8 + $0x13] sm:$0x1]
    %v855 = vlaneseq
    %v856 = vshrl.u32 %v855, 7
    %v857 = vsub.s32 0, %v856
    %v858 = vrot.slane %v854, %v857
    %859 = vmatprep.subr.mxu0 0.0
    %860 = vmatpush1.msra.mxu0 %v838
    %861 = vmatprep.subr.mxu0 0.0
    %862 = vmatpush1.msra.mxu0 %v839
    %863 = vmatprep.subr.mxu0 0.0
    %864 = vmatpush1.msra.mxu0 %v840
    %865 = vmatprep.subr.mxu0 0.0
    %866 = vmatpush1.msra.mxu0 %v841
    %867 = vmatprep.subr.mxu0 0.0
    %868 = vmatpush1.msra.mxu0 %v842
    %869 = vmatprep.subr.mxu0 0.0
    %870 = vmatpush1.msra.mxu0 %v843
    %871 = vmatprep.subr.mxu0 0.0
    %872 = vmatpush1.msra.mxu0 %v844
    %873 = vmatprep.subr.mxu0 0.0
    %874 = vmatpush1.msra.mxu0 %v845
    %875 = vmatprep.subr.mxu0 0.0
    %876 = vmatpush1.msra.mxu0 %v846
    %877 = vmatprep.subr.mxu0 0.0
    %878 = vmatpush1.msra.mxu0 %v847
    %879 = vmatprep.subr.mxu0 0.0
    %880 = vmatpush1.msra.mxu0 %v848
    %881 = vmatprep.subr.mxu0 0.0
    %882 = vmatpush1.msra.mxu0 %v849
    %883 = vmatprep.subr.mxu0 0.0
    %884 = vmatpush1.msra.mxu0 %v850
    %885 = vmatprep.subr.mxu0 0.0
    %886 = vmatpush1.msra.mxu0 %v851
    %887 = vmatprep.subr.mxu0 0.0
    %888 = vmatpush1.msra.mxu0 %v852
    %889 = vmatprep.subr.mxu0 0.0
    %890 = vmatpush1.msra.mxu0 %v853
    %891 = vmatprep.subr.mxu0 0.0
    %892 = vmatpush1.msra.mxu0 0.0
    %893 = vmatprep.subr.mxu0 0.0
    %894 = vmatpush1.msra.mxu0 0.0
    %895 = vmatprep.subr.mxu0 0.0
    %896 = vmatpush1.msra.mxu0 0.0
    %897 = vmatprep.subr.mxu0 0.0
    %898 = vmatpush1.msra.mxu0 0.0
    %899 = vmatprep.subr.mxu0 0.0
    %900 = vmatpush1.msra.mxu0 0.0
    %901 = vmatprep.subr.mxu0 0.0
    %902 = vmatpush1.msra.mxu0 0.0
    %903 = vmatprep.subr.mxu0 0.0
    %904 = vmatpush1.msra.mxu0 0.0
    %905 = vmatprep.subr.mxu0 0.0
    %906 = vmatpush1.msra.mxu0 0.0
    %907 = vmatprep.subr.mxu0 0.0
    %908 = vmatpush1.msra.mxu0 0.0
    %909 = vmatprep.subr.mxu0 0.0
    %910 = vmatpush1.msra.mxu0 0.0
    %911 = vmatprep.subr.mxu0 0.0
    %912 = vmatpush1.msra.mxu0 0.0
    %913 = vmatprep.subr.mxu0 0.0
    %914 = vmatpush1.msra.mxu0 0.0
    %915 = vmatprep.subr.mxu0 0.0
    %916 = vmatpush1.msra.mxu0 0.0
    %917 = vmatprep.subr.mxu0 0.0
    %918 = vmatpush1.msra.mxu0 0.0
    %919 = vmatprep.subr.mxu0 0.0
    %920 = vmatpush1.msra.mxu0 0.0
    %921 = vmatprep.subr.mxu0 0.0
    %922 = vmatpush1.msra.mxu0 0.0
    %923 = vmatprep.mubr.f32.mxu0 0.0
    %924 = vmatmul.mubr.f32.gmra.mrb[0].mxu0 %v837
    %v925 = vpop.f32.mrb[0].mxu0
    %v926 = vadd.f32 %v858, %v925
    %v927 = vpop.f32.mrb[0].mxu0
    %928 = vdwg.mxu0
    %v929 = vadd.f32 %v926, %v530
    %930 = vst [vmem:[#allocation9] sm:$0xff] %v929
    // Predicated region
    $region30: #{tpu_custom_call.1} parent=1 // pred_check
      _
    $region31: #{tpu_custom_call.1} parent=1 // pred_check_branch
      %932 = sbr.rel (0) target = $region33
    $region32: #{tpu_custom_call.1} parent=1 // pred_region
      %s934 = ssub.s32 128, 128
      %935 = vsyncadd [#allocation5], %s934
      %s937 = sshll.u32 [#allocation9], 4
      %s938 = int_to_ptr.vmem [resolvable:$true] %s937
      %940 = dma.vmem_to_hbm [thread:$0]  %s938, 128, %s3, [#allocation5]
    $region33: #{tpu_custom_call.1} parent=1 // pred_fallthru
      _
    // Predicated region
    $region34: #{tpu_custom_call.1} parent=1 // pred_check
      _
    $region35: #{tpu_custom_call.1} parent=1 // pred_check_branch
      %942 = sbr.rel (0) target = $region37
    $region36: #{tpu_custom_call.1} parent=1 // pred_region
      %943 = dma.done [#allocation5], 128
    $region37: #{tpu_custom_call.1} parent=1 // pred_fallthru
      _
    %944 = vsyncpa [#allocation4], 1
    %945 = vsyncpa [#allocation7], 1
    %946 = vsyncpa [#allocation5], 1

</llo_original>
